<compile_context>
chip_gen: v5e
topology: v5e:2x2
jax: 0.10.0
libtpu: 0.0.40
codegen_flags: <defaults>
</compile_context>

<pallas_src>
import jax
import jax.numpy as jnp
from jax.experimental import pallas as pl
from jax.experimental.pallas import tpu as pltpu


def _round_up(n, m):
    return ((n + m - 1) // m) * m


def _make_kernel(and_bias: float, or_bias: float, reduce_or: bool):
    """Builds the fused forward kernel. Frozen biases are baked in as literals."""

    def kernel(x_ref, co_ref, and_wt_ref, or_g_ref, out_ref):
        x = x_ref[...]                                    # [bm, F]  f32
        co = co_ref[...]                                  # [1, F]   relu(CancelOut weight), precomputed
        # CancelOut + CancelBinarization; result is exactly {0,1} so the cast is lossless.
        h1 = (x * co > 1e-6).astype(and_wt_ref.dtype)     # [bm, F]
        # AND layer (L0-masked weight).  Frozen bias (+1) folded into the threshold below.
        h2 = jnp.dot(h1, and_wt_ref[...], preferred_element_type=jnp.float32)   # [bm, Rp]
        # TODO(synk): RuleBinarization's source is not in the provided module; threshold > 0 assumed.
        h3 = (h2 > -and_bias).astype(jnp.float32)         # RuleBinarization, [bm, Rp]
        if reduce_or:
            # OR layer with O == 1: VPU multiply + XLU lane-reduce (avoids an N=1 MXU
            # matmul against a lane-padded weight).  Padded rules contribute 0 because
            # their OR gate is 0.
            y = jnp.sum(h3 * or_g_ref[...], axis=-1, keepdims=True)
        else:
            y = jax.lax.dot_general(
                h3, or_g_ref[...],
                dimension_numbers=(((1,), (1,)), ((), ())),
                preferred_element_type=jnp.float32)
        out_ref[...] = y + or_bias

    return kernel


def _vmem_bytes(bm, F, Rp, O, mm_bytes):
    """Conservative VMEM estimate (lane-padded tiles; weights counted double as margin)."""
    fl = _round_up(F, 128)
    ol = _round_up(max(O, 1), 128)
    x_io = 2 * bm * fl * 4                      # double-buffered x tiles
    y_io = 2 * bm * ol * 4                      # double-buffered out tiles
    weights = fl * 4 + F * Rp * mm_bytes + max(O, 1) * Rp * 4
    inter = bm * Rp * 8 + bm * fl * (4 + mm_bytes)
    return x_io + y_io + 2 * weights + inter


def r2ntab_forward(x, co_w, and_w_masked, or_w_masked, *, and_bias=1.0, or_bias=-0.5,
                   bm=None, use_bf16=True, vmem_budget_bytes=24 * 1024 * 1024):
    """Fused R2Ntab forward.  and_w_masked: [R, F] (L0-masked), or_w_masked: [O, R]."""
    x = jnp.asarray(x, jnp.float32)
    B, F = x.shape
    R, F2 = and_w_masked.shape
    assert F2 == F, (F2, F)
    O = or_w_masked.shape[0]
    Rp = _round_up(R, 128)                       # lane-align the rule dim (weights only)

    mm_dtype = jnp.bfloat16 if use_bf16 else jnp.float32
    mm_bytes = 2 if use_bf16 else 4

    # Parameter preprocessing (plain JAX, once per call):
    #   * pre-transpose / pad the AND weight so the kernel does a plain [bm,F]@[F,Rp] MXU matmul
    #   * pre-apply the CancelOut relu (constant per call)
    and_wt = jnp.pad(jnp.asarray(and_w_masked, jnp.float32).T,
                     ((0, 0), (0, Rp - R))).astype(mm_dtype)          # [F, Rp]
    or_g = jnp.pad(jnp.asarray(or_w_masked, jnp.float32),
                   ((0, 0), (0, Rp - R)))                             # [O, Rp], padded gates = 0
    co2 = jnp.maximum(jnp.asarray(co_w, jnp.float32), 0.0).reshape(1, F)

    # --- batch tile selection -------------------------------------------------
    if bm is None:
        bm = 512
        # Ensure >= 2 grid steps when possible (pipelining + v7x dual-TensorCore sharding).
        while bm > 8 and pl.cdiv(B, bm) < 2 and B > 8:
            bm //= 2
    # Shrink to fit the VMEM budget (v7x has only 64 MiB physical VMEM).
    while bm > 8 and _vmem_bytes(bm, F, Rp, O, mm_bytes) > vmem_budget_bytes:
        bm //= 2
    bm = min(_round_up(max(bm, 8), 8), _round_up(B, 8))

    grid = (pl.cdiv(B, bm),)
    kernel = _make_kernel(float(and_bias), float(or_bias), reduce_or=(O == 1))

    def build(single_buffer_consts):
        def cspec(shape):
            # Grid-invariant operands: constant index_map; single-buffered when supported.
            if single_buffer_consts:
                return pl.BlockSpec(shape, lambda i: (0, 0), pipeline_mode=pl.Buffered(1))
            return pl.BlockSpec(shape, lambda i: (0, 0))

        return pl.pallas_call(
            kernel,
            out_shape=jax.ShapeDtypeStruct((B, O), jnp.float32),
            grid_spec=pltpu.PrefetchScalarGridSpec(
                num_scalar_prefetch=0,
                grid=grid,
                in_specs=[
                    pl.BlockSpec((bm, F), lambda i: (i, 0)),   # x batch tile (pipelined)
                    cspec((1, F)),                             # relu(CancelOut weight)
                    cspec((F, Rp)),                            # AND weight (transposed, padded)
                    cspec((O, Rp)),                            # OR gate row(s) (padded)
                ],
                out_specs=pl.BlockSpec((bm, O), lambda i: (i, 0)),
            ),
            compiler_params=pltpu.CompilerParams(
                dimension_semantics=("parallel",),
                vmem_limit_bytes=48 * 1024 * 1024,
            ),
        )

    args = (x, co2, and_wt, or_g)
    try:
        return build(single_buffer_consts=True)(*args)
    except Exception:
        # Fallback for jax versions without BlockSpec(pipeline_mode=...) / Buffered(1):
        # default double buffering (costs a bit more VMEM, same semantics).
        return build(single_buffer_consts=False)(*args)


def l0_eval_gate(loc, gamma=-0.1, zeta=1.1):
    # Eval-mode hard-concrete gate of the L0 sparse linear layer.
    s = jax.nn.sigmoid(loc) * (zeta - gamma) + gamma
    return jnp.clip(s, 0.0, 1.0)


def reference_forward(x, co_w, and_w_masked, or_w_masked, and_bias=1.0, or_bias=-0.5):
    hp = jax.lax.Precision.HIGHEST
    h = x * jnp.maximum(co_w, 0.0)[None, :]
    h = (h > 1e-6).astype(jnp.float32)
    h = jnp.dot(h, and_w_masked.T, precision=hp) + and_bias
    h = (h > 0.0).astype(jnp.float32)
    return jnp.dot(h, or_w_masked.T, precision=hp) + or_bias


if __name__ == "__main__":
    # Small shapes consistent with the module (binarized tabular features, one output unit).
    B, F, R, O = 512, 16, 32, 1   # batch, in_features, num_rules, out_features

    key = jax.random.PRNGKey(0)
    k_x, k_w, k_loc_and, k_loc_or = jax.random.split(key, 4)

    # Input: binarized tabular features in {0,1} (R2Ntab expects binarized inputs).
    x = jax.random.bernoulli(k_x, 0.5, (B, F)).astype(jnp.float32)

    # Deterministic parameter init mirroring __init__ (frozen fills):
    co_w = jnp.full((F,), 4.0, jnp.float32)                          # CancelOut: zeros + 4
    and_weight = 0.5 * jax.random.normal(k_w, (R, F), jnp.float32)   # and_layer.weight
    and_loc = 0.01 * jax.random.normal(k_loc_and, (R, F), jnp.float32)
    or_weight = jnp.ones((O, R), jnp.float32)                        # weight.fill_(1), frozen
    or_loc = 0.01 * jax.random.normal(k_loc_or, (O, R), jnp.float32)

    # L0 eval-mode masked weights (parameter preprocessing, plain JAX).
    and_w_masked = and_weight * l0_eval_gate(and_loc)
    or_w_masked = or_weight * l0_eval_gate(or_loc)

    # bf16 MXU path (default).  The kernel quantizes the AND weight to bf16; compare
    # against a reference using the same quantized weight (rule activations very close
    # to the threshold could otherwise legitimately flip under rounding).
    out = jax.block_until_ready(r2ntab_forward(x, co_w, and_w_masked, or_w_masked))
    and_w_bf16 = and_w_masked.astype(jnp.bfloat16).astype(jnp.float32)
    ref = reference_forward(x, co_w, and_w_bf16, or_w_masked)
    assert out.shape == (B, O)
    assert jnp.allclose(out, ref, atol=1e-5), (out, ref)

    # Bit-faithful f32 path against the exact module semantics.
    out_f32 = jax.block_until_ready(
        r2ntab_forward(x, co_w, and_w_masked, or_w_masked, use_bf16=False))
    ref_f32 = reference_forward(x, co_w, and_w_masked, or_w_masked)
    assert jnp.allclose(out_f32, ref_f32, atol=1e-4), (out_f32, ref_f32)

    print("KERNEL_OK")
</pallas_src>

<mosaic_0001>
module attributes {stable_mosaic.version = 11 : i64} {
  func.func @kernel(%arg0: i32, %arg1: memref<256x16xf32, #tpu.memory_space<vmem>>, %arg2: memref<1x16xf32, #tpu.memory_space<vmem>>, %arg3: memref<16x128xbf16, #tpu.memory_space<vmem>>, %arg4: memref<1x128xf32, #tpu.memory_space<vmem>>, %arg5: memref<256x1xf32, #tpu.memory_space<vmem>>) attributes {dimension_semantics = [#tpu.dimension_semantics<parallel>], iteration_bounds = array<i64: 2>, scalar_prefetch = 0 : i64, scratch_operands = 0 : i64, tpu.core_type = #tpu.core_type<tc>, window_params = [{transform_indices = @transform_0, window_bounds = array<i64: 256, 16>}, {pipeline_mode = #tpu.pipeline_mode<synchronous>, transform_indices = @transform_1, window_bounds = array<i64: 1, 16>}, {pipeline_mode = #tpu.pipeline_mode<synchronous>, transform_indices = @transform_2, window_bounds = array<i64: 16, 128>}, {pipeline_mode = #tpu.pipeline_mode<synchronous>, transform_indices = @transform_3, window_bounds = array<i64: 1, 128>}, {transform_indices = @transform_4, window_bounds = array<i64: 256, 1>}]} {
    %c0 = arith.constant 0 : index
    %c0_0 = arith.constant 0 : index
    %0 = vector.load %arg1[%c0, %c0_0] : memref<256x16xf32, #tpu.memory_space<vmem>>, vector<256x16xf32>
    %c0_1 = arith.constant 0 : index
    %c0_2 = arith.constant 0 : index
    %1 = vector.load %arg2[%c0_1, %c0_2] : memref<1x16xf32, #tpu.memory_space<vmem>>, vector<1x16xf32>
    %2 = vector.broadcast %1 : vector<1x16xf32> to vector<256x16xf32>
    %3 = arith.mulf %0, %2 : vector<256x16xf32>
    %cst = arith.constant 9.99999997E-7 : f32
    %4 = vector.broadcast %cst : f32 to vector<256x16xf32>
    %5 = arith.cmpf ogt, %3, %4 : vector<256x16xf32>
    %6 = arith.extui %5 : vector<256x16xi1> to vector<256x16xi32>
    %7 = arith.sitofp %6 : vector<256x16xi32> to vector<256x16xf32>
    %8 = arith.truncf %7 : vector<256x16xf32> to vector<256x16xbf16>
    %c0_3 = arith.constant 0 : index
    %c0_4 = arith.constant 0 : index
    %9 = vector.load %arg3[%c0_3, %c0_4] : memref<16x128xbf16, #tpu.memory_space<vmem>>, vector<16x128xbf16>
    %cst_5 = arith.constant dense<0.000000e+00> : vector<256x128xf32>
    %10 = tpu.matmul %8, %9, %cst_5 {dimension_numbers = #tpu.dot_dimension_numbers<[1], [0], [0], [1], [0, 0, 1, 1], [], []>} : vector<256x16xbf16>, vector<16x128xbf16>, vector<256x128xf32> -> vector<256x128xf32>
    %cst_6 = arith.constant -1.000000e+00 : f32
    %11 = vector.broadcast %cst_6 : f32 to vector<256x128xf32>
    %12 = arith.cmpf ogt, %10, %11 : vector<256x128xf32>
    %13 = arith.extui %12 : vector<256x128xi1> to vector<256x128xi32>
    %14 = arith.sitofp %13 : vector<256x128xi32> to vector<256x128xf32>
    %c0_7 = arith.constant 0 : index
    %c0_8 = arith.constant 0 : index
    %15 = vector.load %arg4[%c0_7, %c0_8] : memref<1x128xf32, #tpu.memory_space<vmem>>, vector<1x128xf32>
    %16 = vector.broadcast %15 : vector<1x128xf32> to vector<256x128xf32>
    %17 = arith.mulf %14, %16 : vector<256x128xf32>
    %cst_9 = arith.constant dense<0.000000e+00> : vector<256xf32>
    %18 = vector.multi_reduction <add>, %17, %cst_9 [1] : vector<256x128xf32> to vector<256xf32>
    %19 = vector.shape_cast %18 : vector<256xf32> to vector<256x1xf32>
    %cst_10 = arith.constant -5.000000e-01 : f32
    %20 = vector.broadcast %cst_10 : f32 to vector<256x1xf32>
    %21 = arith.addf %19, %20 : vector<256x1xf32>
    %c0_11 = arith.constant 0 : index
    %c0_12 = arith.constant 0 : index
    %22 = vector.load %arg5[%c0_11, %c0_12] : memref<256x1xf32, #tpu.memory_space<vmem>>, vector<256x1xf32>
    tpu.vector_store %arg5[%c0_11, %c0_12], %21 {strides = array<i32>} : memref<256x1xf32, #tpu.memory_space<vmem>>, vector<256x1xf32>,
    return
  }
  func.func @transform_0(%arg0: i32) -> (i32, i32) {
    %c0_i32 = arith.constant 0 : i32
    %c0_i32_0 = arith.constant 0 : i32
    return %arg0, %c0_i32 : i32, i32
  }
  func.func @transform_1(%arg0: i32) -> (i32, i32) {
    %c0_i32 = arith.constant 0 : i32
    %c0_i32_0 = arith.constant 0 : i32
    %c0_i32_1 = arith.constant 0 : i32
    return %c0_i32, %c0_i32_0 : i32, i32
  }
  func.func @transform_2(%arg0: i32) -> (i32, i32) {
    %c0_i32 = arith.constant 0 : i32
    %c0_i32_0 = arith.constant 0 : i32
    %c0_i32_1 = arith.constant 0 : i32
    return %c0_i32, %c0_i32_0 : i32, i32
  }
  func.func @transform_3(%arg0: i32) -> (i32, i32) {
    %c0_i32 = arith.constant 0 : i32
    %c0_i32_0 = arith.constant 0 : i32
    %c0_i32_1 = arith.constant 0 : i32
    return %c0_i32, %c0_i32_0 : i32, i32
  }
  func.func @transform_4(%arg0: i32) -> (i32, i32) {
    %c0_i32 = arith.constant 0 : i32
    %c0_i32_0 = arith.constant 0 : i32
    return %arg0, %c0_i32 : i32, i32
  }
}

module attributes {stable_mosaic.version = 11 : i64} {
  func.func @kernel(%arg0: i32, %arg1: memref<256x16xf32, #tpu.memory_space<vmem>>, %arg2: memref<1x16xf32, #tpu.memory_space<vmem>>, %arg3: memref<16x128xbf16, #tpu.memory_space<vmem>>, %arg4: memref<1x128xf32, #tpu.memory_space<vmem>>, %arg5: memref<256x1xf32, #tpu.memory_space<vmem>>) attributes {dimension_semantics = [#tpu.dimension_semantics<parallel>], iteration_bounds = array<i64: 2>, scalar_prefetch = 0 : i64, scratch_operands = 0 : i64, tpu.core_type = #tpu.core_type<tc>, window_params = [{transform_indices = @transform_0, window_bounds = array<i64: 256, 16>}, {pipeline_mode = #tpu.pipeline_mode<synchronous>, transform_indices = @transform_1, window_bounds = array<i64: 1, 16>}, {pipeline_mode = #tpu.pipeline_mode<synchronous>, transform_indices = @transform_2, window_bounds = array<i64: 16, 128>}, {pipeline_mode = #tpu.pipeline_mode<synchronous>, transform_indices = @transform_3, window_bounds = array<i64: 1, 128>}, {transform_indices = @transform_4, window_bounds = array<i64: 256, 1>}]} {
    %c0 = arith.constant 0 : index
    %c0_0 = arith.constant 0 : index
    %0 = vector.load %arg1[%c0, %c0_0] : memref<256x16xf32, #tpu.memory_space<vmem>>, vector<256x16xf32>
    %c0_1 = arith.constant 0 : index
    %c0_2 = arith.constant 0 : index
    %1 = vector.load %arg2[%c0_1, %c0_2] : memref<1x16xf32, #tpu.memory_space<vmem>>, vector<1x16xf32>
    %2 = vector.broadcast %1 : vector<1x16xf32> to vector<256x16xf32>
    %3 = arith.mulf %0, %2 : vector<256x16xf32>
    %cst = arith.constant 9.99999997E-7 : f32
    %4 = vector.broadcast %cst : f32 to vector<256x16xf32>
    %5 = arith.cmpf ogt, %3, %4 : vector<256x16xf32>
    %6 = arith.extui %5 : vector<256x16xi1> to vector<256x16xi32>
    %7 = arith.sitofp %6 : vector<256x16xi32> to vector<256x16xf32>
    %8 = arith.truncf %7 : vector<256x16xf32> to vector<256x16xbf16>
    %c0_3 = arith.constant 0 : index
    %c0_4 = arith.constant 0 : index
    %9 = vector.load %arg3[%c0_3, %c0_4] : memref<16x128xbf16, #tpu.memory_space<vmem>>, vector<16x128xbf16>
    %cst_5 = arith.constant dense<0.000000e+00> : vector<256x128xf32>
    %10 = tpu.matmul %8, %9, %cst_5 {dimension_numbers = #tpu.dot_dimension_numbers<[1], [0], [0], [1], [0, 0, 1, 1], [], []>} : vector<256x16xbf16>, vector<16x128xbf16>, vector<256x128xf32> -> vector<256x128xf32>
    %cst_6 = arith.constant -1.000000e+00 : f32
    %11 = vector.broadcast %cst_6 : f32 to vector<256x128xf32>
    %12 = arith.cmpf ogt, %10, %11 : vector<256x128xf32>
    %13 = arith.extui %12 : vector<256x128xi1> to vector<256x128xi32>
    %14 = arith.sitofp %13 : vector<256x128xi32> to vector<256x128xf32>
    %c0_7 = arith.constant 0 : index
    %c0_8 = arith.constant 0 : index
    %15 = vector.load %arg4[%c0_7, %c0_8] : memref<1x128xf32, #tpu.memory_space<vmem>>, vector<1x128xf32>
    %16 = vector.broadcast %15 : vector<1x128xf32> to vector<256x128xf32>
    %17 = arith.mulf %14, %16 : vector<256x128xf32>
    %cst_9 = arith.constant dense<0.000000e+00> : vector<256xf32>
    %18 = vector.multi_reduction <add>, %17, %cst_9 [1] : vector<256x128xf32> to vector<256xf32>
    %19 = vector.shape_cast %18 : vector<256xf32> to vector<256x1xf32>
    %cst_10 = arith.constant -5.000000e-01 : f32
    %20 = vector.broadcast %cst_10 : f32 to vector<256x1xf32>
    %21 = arith.addf %19, %20 : vector<256x1xf32>
    %c0_11 = arith.constant 0 : index
    %c0_12 = arith.constant 0 : index
    %22 = vector.load %arg5[%c0_11, %c0_12] : memref<256x1xf32, #tpu.memory_space<vmem>>, vector<256x1xf32>
    tpu.vector_store %arg5[%c0_11, %c0_12], %21 {strides = array<i32>} : memref<256x1xf32, #tpu.memory_space<vmem>>, vector<256x1xf32>,
    return
  }
  func.func @transform_0(%arg0: i32) -> (i32, i32) {
    %c0_i32 = arith.constant 0 : i32
    %c0_i32_0 = arith.constant 0 : i32
    return %arg0, %c0_i32 : i32, i32
  }
  func.func @transform_1(%arg0: i32) -> (i32, i32) {
    %c0_i32 = arith.constant 0 : i32
    %c0_i32_0 = arith.constant 0 : i32
    %c0_i32_1 = arith.constant 0 : i32
    return %c0_i32, %c0_i32_0 : i32, i32
  }
  func.func @transform_2(%arg0: i32) -> (i32, i32) {
    %c0_i32 = arith.constant 0 : i32
    %c0_i32_0 = arith.constant 0 : i32
    %c0_i32_1 = arith.constant 0 : i32
    return %c0_i32, %c0_i32_0 : i32, i32
  }
  func.func @transform_3(%arg0: i32) -> (i32, i32) {
    %c0_i32 = arith.constant 0 : i32
    %c0_i32_0 = arith.constant 0 : i32
    %c0_i32_1 = arith.constant 0 : i32
    return %c0_i32, %c0_i32_0 : i32, i32
  }
  func.func @transform_4(%arg0: i32) -> (i32, i32) {
    %c0_i32 = arith.constant 0 : i32
    %c0_i32_0 = arith.constant 0 : i32
    return %arg0, %c0_i32 : i32, i32
  }
}

</mosaic_0001>

<llo_original>
// kernel: tpu_custom_call.1
$region0: #{tpu_custom_call.1}
  #allocation0 [shape = 'u32[]', space=smem, size = 0x4, offset = 0x4, fixed_abs, tag = 'smem constant byte address 0x4 - core index']
  #allocation1 [shape = 'u32[72,128]{1,0:T(1,128)}', space=vmem, size = 0x9000, scoped, tag = 'internal scratch']
  %s0 = inlined_call_operand.vmem [shape: f32[512,16], index: 0, kind: input, shape index: {}]
  %s1 = inlined_call_operand.vmem [shape: f32[1,16], index: 1, kind: input, shape index: {}]
  %s2 = inlined_call_operand.vmem [shape: bf16[16,128], index: 2, kind: input, shape index: {}]
  %s3 = inlined_call_operand.vmem [shape: f32[1,128], index: 3, kind: input, shape index: {}]
  %s4 = inlined_call_operand.vmem [shape: f32[512,1], index: 4, kind: output, shape index: {}]
  %s5 = sld [smem:[#allocation0]]
  $region49: #{tpu_custom_call.1} parent=0
    _
  %s7 = ssub.s32 1, %s5
  %s8 = scalar_select 0, %s7, %s5
  loop: start=0, step=1, limit=4
  $region2: #{tpu_custom_call.1} parent=0 // loop_pre_header
    _
  $region3: #{tpu_custom_call.1} parent=0 // loop_header
    %s10 = sphi 0, %s14
    %p11 = scmp.ge.s32.totalorder %s10, 4
    %s20 = sphi 0, %s22
    %s23 = sphi 0, %s20
    %s24 = sphi 0, %s23
    %s40 = sphi 0, %s24
    %s44 = sphi 0, %s44
    %s46 = sphi 0, %s44
    %s47 = sphi 0, %s46
    %s61 = sphi 0, %s47
    %s65 = sphi 0, %s65
    %s67 = sphi 0, %s65
    %s68 = sphi 0, %s67
    %s82 = sphi 0, %s68
    %s86 = sphi 0, %s86
    %s88 = sphi 0, %s86
    %s89 = sphi 0, %s88
    %s103 = sphi 0, %s89
    %s109 = sphi 0, %s111
    %s112 = sphi 0, %s109
    %s113 = sphi 0, %s112
    %s129 = sphi 0, %s113
  $region4: #{tpu_custom_call.1} parent=0 // loop_header_branch
    %13 = sbr.rel (%p11) target = $region8
  $region5: #{tpu_custom_call.1} parent=0 // loop_body
    %s15 = ssub.s32 %s10, 1
    %s16 = ssub.s32 %s10, 2
    %s17 = sadd.s32 %s10, 1
    %s18 = ssub.s32 %s10, %s17
    %p19 = scmp.eq.s32.totalorder %s18, 0
    %s21 = sadd.s32 %s20, 1
    %s22 = scalar_select %p19, %s20, %s21
    %p25 = pneg %p19
    %p26 = scmp.eq.s32.totalorder %s10, 1
    %p27 = por %p25, %p26
    %p28 = scmp.ne.s32.totalorder %s20, %s23
    %p29 = scmp.eq.s32.totalorder %s10, 0
    %p30 = por %p28, %p29
    %p31 = scmp.ne.s32.totalorder %s20, %s23
    %p32 = scmp.eq.s32.totalorder %s15, 1
    %p33 = por %p31, %p32
    %p34 = scmp.ne.s32.totalorder %s23, %s24
    %p35 = scmp.eq.s32.totalorder %s15, 0
    %p36 = por %p34, %p35
    %p37 = scmp.ne.s32.totalorder %s23, %s24
    %p38 = scmp.eq.s32.totalorder %s16, 1
    %p39 = por %p37, %p38
    %p41 = scmp.ne.s32.totalorder %s24, %s40
    %p42 = scmp.eq.s32.totalorder %s16, 0
    %p43 = por %p41, %p42
    %s45 = sadd.s32 %s44, 1
    %p48 = scmp.eq.s32.totalorder %s10, 1
    %p49 = scmp.ne.s32.totalorder %s44, %s46
    %p50 = scmp.eq.s32.totalorder %s10, 0
    %p51 = por %p49, %p50
    %p52 = scmp.ne.s32.totalorder %s44, %s46
    %p53 = scmp.eq.s32.totalorder %s15, 1
    %p54 = por %p52, %p53
    %p55 = scmp.ne.s32.totalorder %s46, %s47
    %p56 = scmp.eq.s32.totalorder %s15, 0
    %p57 = por %p55, %p56
    %p58 = scmp.ne.s32.totalorder %s46, %s47
    %p59 = scmp.eq.s32.totalorder %s16, 1
    %p60 = por %p58, %p59
    %p62 = scmp.ne.s32.totalorder %s47, %s61
    %p63 = scmp.eq.s32.totalorder %s16, 0
    %p64 = por %p62, %p63
    %s66 = sadd.s32 %s65, 1
    %p69 = scmp.eq.s32.totalorder %s10, 1
    %p70 = scmp.ne.s32.totalorder %s65, %s67
    %p71 = scmp.eq.s32.totalorder %s10, 0
    %p72 = por %p70, %p71
    %p73 = scmp.ne.s32.totalorder %s65, %s67
    %p74 = scmp.eq.s32.totalorder %s15, 1
    %p75 = por %p73, %p74
    %p76 = scmp.ne.s32.totalorder %s67, %s68
    %p77 = scmp.eq.s32.totalorder %s15, 0
    %p78 = por %p76, %p77
    %p79 = scmp.ne.s32.totalorder %s67, %s68
    %p80 = scmp.eq.s32.totalorder %s16, 1
    %p81 = por %p79, %p80
    %p83 = scmp.ne.s32.totalorder %s68, %s82
    %p84 = scmp.eq.s32.totalorder %s16, 0
    %p85 = por %p83, %p84
    %s87 = sadd.s32 %s86, 1
    %p90 = scmp.eq.s32.totalorder %s10, 1
    %p91 = scmp.ne.s32.totalorder %s86, %s88
    %p92 = scmp.eq.s32.totalorder %s10, 0
    %p93 = por %p91, %p92
    %p94 = scmp.ne.s32.totalorder %s86, %s88
    %p95 = scmp.eq.s32.totalorder %s15, 1
    %p96 = por %p94, %p95
    %p97 = scmp.ne.s32.totalorder %s88, %s89
    %p98 = scmp.eq.s32.totalorder %s15, 0
    %p99 = por %p97, %p98
    %p100 = scmp.ne.s32.totalorder %s88, %s89
    %p101 = scmp.eq.s32.totalorder %s16, 1
    %p102 = por %p100, %p101
    %p104 = scmp.ne.s32.totalorder %s89, %s103
    %p105 = scmp.eq.s32.totalorder %s16, 0
    %p106 = por %p104, %p105
    %s107 = ssub.s32 %s10, %s17
    %p108 = scmp.eq.s32.totalorder %s107, 0
    %s110 = sadd.s32 %s109, 1
    %s111 = scalar_select %p108, %s109, %s110
    %p114 = pneg %p108
    %p115 = scmp.eq.s32.totalorder %s10, 1
    %p116 = por %p114, %p115
    %p117 = scmp.ne.s32.totalorder %s109, %s112
    %p118 = scmp.eq.s32.totalorder %s10, 0
    %p119 = por %p117, %p118
    %p120 = scmp.ne.s32.totalorder %s109, %s112
    %p121 = scmp.eq.s32.totalorder %s15, 1
    %p122 = por %p120, %p121
    %p123 = scmp.ne.s32.totalorder %s112, %s113
    %p124 = scmp.eq.s32.totalorder %s15, 0
    %p125 = por %p123, %p124
    %p126 = scmp.ne.s32.totalorder %s112, %s113
    %p127 = scmp.eq.s32.totalorder %s16, 1
    %p128 = por %p126, %p127
    %p130 = scmp.ne.s32.totalorder %s113, %s129
    %p131 = scmp.eq.s32.totalorder %s16, 0
    %p132 = por %p130, %p131
    %p133 = scmp.le.s32.totalorder 1, %s10
    %p134 = scmp.lt.s32.totalorder %s10, 3
    %p135 = pnand %p133, %p134
    %p136 = pneg %p135
    // Predicated region
    $region9: #{tpu_custom_call.1} parent=5 // pred_check
      _
    $region10: #{tpu_custom_call.1} parent=5 // pred_check_branch
      %138 = sbr.rel (%p135) target = $region12
    $region11: #{tpu_custom_call.1} parent=5 // pred_region
      %s139 = ssub.s32 %s10, 1
      // Predicated region
      $region13: #{tpu_custom_call.1} parent=11 // pred_check
        %p140 = pneg %p57
      $region14: #{tpu_custom_call.1} parent=11 // pred_check_branch
        %142 = sbr.rel (%p140) target = $region16
      $region15: #{tpu_custom_call.1} parent=11 // pred_region
        _
      $region16: #{tpu_custom_call.1} parent=11 // pred_fallthru
        _
      // Predicated region
      $region17: #{tpu_custom_call.1} parent=11 // pred_check
        %p143 = pneg %p78
      $region18: #{tpu_custom_call.1} parent=11 // pred_check_branch
        %145 = sbr.rel (%p143) target = $region20
      $region19: #{tpu_custom_call.1} parent=11 // pred_region
        _
      $region20: #{tpu_custom_call.1} parent=11 // pred_fallthru
        _
      // Predicated region
      $region21: #{tpu_custom_call.1} parent=11 // pred_check
        %p146 = pneg %p99
      $region22: #{tpu_custom_call.1} parent=11 // pred_check_branch
        %148 = sbr.rel (%p146) target = $region24
      $region23: #{tpu_custom_call.1} parent=11 // pred_region
        _
      $region24: #{tpu_custom_call.1} parent=11 // pred_fallthru
        _
    $region12: #{tpu_custom_call.1} parent=5 // pred_fallthru
      _
    %p149 = scmp.lt.s32.totalorder %s10, 2
    // Predicated region
    $region25: #{tpu_custom_call.1} parent=5 // pred_check
      %p150 = pneg %p149
    $region26: #{tpu_custom_call.1} parent=5 // pred_check_branch
      %152 = sbr.rel (%p150) target = $region28
    $region27: #{tpu_custom_call.1} parent=5 // pred_region
      // Predicated region
      $region29: #{tpu_custom_call.1} parent=27 // pred_check
        %p153 = pneg %p30
      $region30: #{tpu_custom_call.1} parent=27 // pred_check_branch
        %155 = sbr.rel (%p153) target = $region32
      $region31: #{tpu_custom_call.1} parent=27 // pred_region
        %s156 = smul.u32 32, %s10
        %p157 = scmp.lt.s32.totalorder %s156, 63
        %s158 = scalar_select %p157, %s156, 63
        %s159 = smul.addr %s158, 8
        %s160 = scalar_lea.vmem %s0, %s159
        %s161 = smul.u32 32, %s10
      $region32: #{tpu_custom_call.1} parent=27 // pred_fallthru
        _
    $region28: #{tpu_custom_call.1} parent=5 // pred_fallthru
      _
    %p162 = scmp.le.s32.totalorder 1, %s10
    %p163 = scmp.lt.s32.totalorder %s10, 3
    %p164 = pnand %p162, %p163
    %p165 = pneg %p164
    // Predicated region
    $region33: #{tpu_custom_call.1} parent=5 // pred_check
      _
    $region34: #{tpu_custom_call.1} parent=5 // pred_check_branch
      %167 = sbr.rel (%p164) target = $region36
    $region35: #{tpu_custom_call.1} parent=5 // pred_region
      %s168 = ssub.s32 %s10, 1
      %s169 = smul.u32 32, %s15
      %p170 = scmp.lt.s32.totalorder %s169, 63
      %s171 = scalar_select %p170, %s169, 63
      %s172 = smul.addr %s171, 8
      %s173 = scalar_lea.vmem %s0, %s172
      %p174 = pneg %p36
      %p175 = pneg %p33
      %p176 = pneg %p57
      %p177 = pneg %p54
      %p178 = pneg %p78
      %p179 = pneg %p75
      %p180 = pneg %p99
      %p181 = pneg %p96
      %p182 = pneg %p125
      %p183 = pneg %p122
      %s184 = smul.u32 32, %s15
      %p185 = scmp.lt.s32.totalorder %s184, 63
      %s186 = scalar_select %p185, %s184, 63
      %s187 = smul.addr %s186, 8
      %s188 = scalar_lea.vmem %s4, %s187
      %s189 = smul.u32 32, %s15
      %p190 = scmp.lt.s32.totalorder %s189, 63
      %s191 = scalar_select %p190, %s189, 63
      %s192 = smul.addr %s191, 8
      %s193 = scalar_lea.vmem %s0, %s192
      %s194 = smul.u32 32, %s15
      %s195 = smul.u32 32, %s15
      %p196 = scmp.lt.s32.totalorder %s195, 63
      %s197 = scalar_select %p196, %s195, 63
      %s198 = smul.addr %s197, 8
      %s199 = scalar_lea.vmem %s4, %s198
      %s200 = smul.u32 32, %s15
      %v202 = vld [vmem:[%s193] sm:$0xff]
      %v203 = vld [vmem:[%s193 + $0x8] sm:$0xff]
      %v204 = vld [vmem:[%s193 + $0x10] sm:$0xff]
      %v205 = vld [vmem:[%s193 + $0x18] sm:$0xff]
      %v206 = vld [vmem:[%s193 + $0x20] sm:$0xff]
      %v207 = vld [vmem:[%s193 + $0x28] sm:$0xff]
      %v208 = vld [vmem:[%s193 + $0x30] sm:$0xff]
      %v209 = vld [vmem:[%s193 + $0x38] sm:$0xff]
      %v210 = vld [vmem:[%s193 + $0x40] sm:$0xff]
      %v211 = vld [vmem:[%s193 + $0x48] sm:$0xff]
      %v212 = vld [vmem:[%s193 + $0x50] sm:$0xff]
      %v213 = vld [vmem:[%s193 + $0x58] sm:$0xff]
      %v214 = vld [vmem:[%s193 + $0x60] sm:$0xff]
      %v215 = vld [vmem:[%s193 + $0x68] sm:$0xff]
      %v216 = vld [vmem:[%s193 + $0x70] sm:$0xff]
      %v217 = vld [vmem:[%s193 + $0x78] sm:$0xff]
      %v218 = vld [vmem:[%s193 + $0x80] sm:$0xff]
      %v219 = vld [vmem:[%s193 + $0x88] sm:$0xff]
      %v220 = vld [vmem:[%s193 + $0x90] sm:$0xff]
      %v221 = vld [vmem:[%s193 + $0x98] sm:$0xff]
      %v222 = vld [vmem:[%s193 + $0xa0] sm:$0xff]
      %v223 = vld [vmem:[%s193 + $0xa8] sm:$0xff]
      %v224 = vld [vmem:[%s193 + $0xb0] sm:$0xff]
      %v225 = vld [vmem:[%s193 + $0xb8] sm:$0xff]
      %v226 = vld [vmem:[%s193 + $0xc0] sm:$0xff]
      %v227 = vld [vmem:[%s193 + $0xc8] sm:$0xff]
      %v228 = vld [vmem:[%s193 + $0xd0] sm:$0xff]
      %v229 = vld [vmem:[%s193 + $0xd8] sm:$0xff]
      %v230 = vld [vmem:[%s193 + $0xe0] sm:$0xff]
      %v231 = vld [vmem:[%s193 + $0xe8] sm:$0xff]
      %v232 = vld [vmem:[%s193 + $0xf0] sm:$0xff]
      %v233 = vld [vmem:[%s193 + $0xf8] sm:$0xff]
      %v234 = vld [vmem:[%s1] sm:$0x1]
      %v236 = vperm.slane %v234, 0
      %v238 = vmul.f32 %v202, %v236
      %v239 = vmul.f32 %v203, %v236
      %v240 = vmul.f32 %v204, %v236
      %v241 = vmul.f32 %v205, %v236
      %v242 = vmul.f32 %v206, %v236
      %v243 = vmul.f32 %v207, %v236
      %v244 = vmul.f32 %v208, %v236
      %v245 = vmul.f32 %v209, %v236
      %v246 = vmul.f32 %v210, %v236
      %v247 = vmul.f32 %v211, %v236
      %v248 = vmul.f32 %v212, %v236
      %v249 = vmul.f32 %v213, %v236
      %v250 = vmul.f32 %v214, %v236
      %v251 = vmul.f32 %v215, %v236
      %v252 = vmul.f32 %v216, %v236
      %v253 = vmul.f32 %v217, %v236
      %v254 = vmul.f32 %v218, %v236
      %v255 = vmul.f32 %v219, %v236
      %v256 = vmul.f32 %v220, %v236
      %v257 = vmul.f32 %v221, %v236
      %v258 = vmul.f32 %v222, %v236
      %v259 = vmul.f32 %v223, %v236
      %v260 = vmul.f32 %v224, %v236
      %v261 = vmul.f32 %v225, %v236
      %v262 = vmul.f32 %v226, %v236
      %v263 = vmul.f32 %v227, %v236
      %v264 = vmul.f32 %v228, %v236
      %v265 = vmul.f32 %v229, %v236
      %v266 = vmul.f32 %v230, %v236
      %v267 = vmul.f32 %v231, %v236
      %v268 = vmul.f32 %v232, %v236
      %v269 = vmul.f32 %v233, %v236
      %vm270 = vcmp.gt.f32.partialorder %v238, 1e-06
      %vm271 = vcmp.gt.f32.partialorder %v239, 1e-06
      %vm272 = vcmp.gt.f32.partialorder %v240, 1e-06
      %vm273 = vcmp.gt.f32.partialorder %v241, 1e-06
      %vm274 = vcmp.gt.f32.partialorder %v242, 1e-06
      %vm275 = vcmp.gt.f32.partialorder %v243, 1e-06
      %vm276 = vcmp.gt.f32.partialorder %v244, 1e-06
      %vm277 = vcmp.gt.f32.partialorder %v245, 1e-06
      %vm278 = vcmp.gt.f32.partialorder %v246, 1e-06
      %vm279 = vcmp.gt.f32.partialorder %v247, 1e-06
      %vm280 = vcmp.gt.f32.partialorder %v248, 1e-06
      %vm281 = vcmp.gt.f32.partialorder %v249, 1e-06
      %vm282 = vcmp.gt.f32.partialorder %v250, 1e-06
      %vm283 = vcmp.gt.f32.partialorder %v251, 1e-06
      %vm284 = vcmp.gt.f32.partialorder %v252, 1e-06
      %vm285 = vcmp.gt.f32.partialorder %v253, 1e-06
      %vm286 = vcmp.gt.f32.partialorder %v254, 1e-06
      %vm287 = vcmp.gt.f32.partialorder %v255, 1e-06
      %vm288 = vcmp.gt.f32.partialorder %v256, 1e-06
      %vm289 = vcmp.gt.f32.partialorder %v257, 1e-06
      %vm290 = vcmp.gt.f32.partialorder %v258, 1e-06
      %vm291 = vcmp.gt.f32.partialorder %v259, 1e-06
      %vm292 = vcmp.gt.f32.partialorder %v260, 1e-06
      %vm293 = vcmp.gt.f32.partialorder %v261, 1e-06
      %vm294 = vcmp.gt.f32.partialorder %v262, 1e-06
      %vm295 = vcmp.gt.f32.partialorder %v263, 1e-06
      %vm296 = vcmp.gt.f32.partialorder %v264, 1e-06
      %vm297 = vcmp.gt.f32.partialorder %v265, 1e-06
      %vm298 = vcmp.gt.f32.partialorder %v266, 1e-06
      %vm299 = vcmp.gt.f32.partialorder %v267, 1e-06
      %vm300 = vcmp.gt.f32.partialorder %v268, 1e-06
      %vm301 = vcmp.gt.f32.partialorder %v269, 1e-06
      %v302 = vsel %vm270, 1, 0
      %v303 = vsel %vm271, 1, 0
      %v304 = vsel %vm272, 1, 0
      %v305 = vsel %vm273, 1, 0
      %v306 = vsel %vm274, 1, 0
      %v307 = vsel %vm275, 1, 0
      %v308 = vsel %vm276, 1, 0
      %v309 = vsel %vm277, 1, 0
      %v310 = vsel %vm278, 1, 0
      %v311 = vsel %vm279, 1, 0
      %v312 = vsel %vm280, 1, 0
      %v313 = vsel %vm281, 1, 0
      %v314 = vsel %vm282, 1, 0
      %v315 = vsel %vm283, 1, 0
      %v316 = vsel %vm284, 1, 0
      %v317 = vsel %vm285, 1, 0
      %v318 = vsel %vm286, 1, 0
      %v319 = vsel %vm287, 1, 0
      %v320 = vsel %vm288, 1, 0
      %v321 = vsel %vm289, 1, 0
      %v322 = vsel %vm290, 1, 0
      %v323 = vsel %vm291, 1, 0
      %v324 = vsel %vm292, 1, 0
      %v325 = vsel %vm293, 1, 0
      %v326 = vsel %vm294, 1, 0
      %v327 = vsel %vm295, 1, 0
      %v328 = vsel %vm296, 1, 0
      %v329 = vsel %vm297, 1, 0
      %v330 = vsel %vm298, 1, 0
      %v331 = vsel %vm299, 1, 0
      %v332 = vsel %vm300, 1, 0
      %v333 = vsel %vm301, 1, 0
      %v334 = vcvt.s32.f32 %v302
      %v335 = vcvt.s32.f32 %v303
      %v336 = vcvt.s32.f32 %v304
      %v337 = vcvt.s32.f32 %v305
      %v338 = vcvt.s32.f32 %v306
      %v339 = vcvt.s32.f32 %v307
      %v340 = vcvt.s32.f32 %v308
      %v341 = vcvt.s32.f32 %v309
      %v342 = vcvt.s32.f32 %v310
      %v343 = vcvt.s32.f32 %v311
      %v344 = vcvt.s32.f32 %v312
      %v345 = vcvt.s32.f32 %v313
      %v346 = vcvt.s32.f32 %v314
      %v347 = vcvt.s32.f32 %v315
      %v348 = vcvt.s32.f32 %v316
      %v349 = vcvt.s32.f32 %v317
      %v350 = vcvt.s32.f32 %v318
      %v351 = vcvt.s32.f32 %v319
      %v352 = vcvt.s32.f32 %v320
      %v353 = vcvt.s32.f32 %v321
      %v354 = vcvt.s32.f32 %v322
      %v355 = vcvt.s32.f32 %v323
      %v356 = vcvt.s32.f32 %v324
      %v357 = vcvt.s32.f32 %v325
      %v358 = vcvt.s32.f32 %v326
      %v359 = vcvt.s32.f32 %v327
      %v360 = vcvt.s32.f32 %v328
      %v361 = vcvt.s32.f32 %v329
      %v362 = vcvt.s32.f32 %v330
      %v363 = vcvt.s32.f32 %v331
      %v364 = vcvt.s32.f32 %v332
      %v365 = vcvt.s32.f32 %v333
      %v366 = vpack.c.bf16 %v335, %v334
      %v367 = vpack.c.bf16 %v337, %v336
      %v368 = vpack.c.bf16 %v339, %v338
      %v369 = vpack.c.bf16 %v341, %v340
      %v370 = vpack.c.bf16 %v343, %v342
      %v371 = vpack.c.bf16 %v345, %v344
      %v372 = vpack.c.bf16 %v347, %v346
      %v373 = vpack.c.bf16 %v349, %v348
      %v374 = vpack.c.bf16 %v351, %v350
      %v375 = vpack.c.bf16 %v353, %v352
      %v376 = vpack.c.bf16 %v355, %v354
      %v377 = vpack.c.bf16 %v357, %v356
      %v378 = vpack.c.bf16 %v359, %v358
      %v379 = vpack.c.bf16 %v361, %v360
      %v380 = vpack.c.bf16 %v363, %v362
      %v381 = vpack.c.bf16 %v365, %v364
      %v382 = vld [vmem:[%s2] sm:$0xf]
      %v383 = vld [vmem:[%s2 + $0x4] sm:$0xf]
      %v386 = vunpack.c.l.b16 %v382
      %v387 = vunpack.c.l.b16 %v383
      %v388 = vpack.c.b16 %v387, %v386
      %vm390 = vcmask 130048
      %v392 = vsel %vm390, %v366, 0
      %v395 = vsel %vm390, %v367, 0
      %v398 = vsel %vm390, %v368, 0
      %v401 = vsel %vm390, %v369, 0
      %v404 = vsel %vm390, %v370, 0
      %v407 = vsel %vm390, %v371, 0
      %v410 = vsel %vm390, %v372, 0
      %v413 = vsel %vm390, %v373, 0
      %v416 = vsel %vm390, %v374, 0
      %v419 = vsel %vm390, %v375, 0
      %v422 = vsel %vm390, %v376, 0
      %v425 = vsel %vm390, %v377, 0
      %v428 = vsel %vm390, %v378, 0
      %v431 = vsel %vm390, %v379, 0
      %v434 = vsel %vm390, %v380, 0
      %v437 = vsel %vm390, %v381, 0
      %439 = vmatpush.bf16.msra.mxu0 0
      %440 = vmatpush.bf16.msra.mxu0 0
      %441 = vmatpush.bf16.msra.mxu0 0
      %442 = vmatpush.bf16.msra.mxu0 0
      %443 = vmatpush.bf16.msra.mxu0 0
      %444 = vmatpush.bf16.msra.mxu0 0
      %445 = vmatpush.bf16.msra.mxu0 0
      %446 = vmatpush.bf16.msra.mxu0 %v388
      %447 = vmatmul.bf16.gmra.mxu0 %v392
      %v448 = vpop.f32.mrf.mxu0
      %v449 = vadd.f32 0.0, %v448
      %v450 = vpop.f32.mrf.mxu0
      %v451 = vadd.f32 0.0, %v450
      %452 = vmatmul.bf16.gmra.mxu0 %v395
      %v453 = vpop.f32.mrf.mxu0
      %v454 = vadd.f32 0.0, %v453
      %v455 = vpop.f32.mrf.mxu0
      %v456 = vadd.f32 0.0, %v455
      %457 = vmatmul.bf16.gmra.mxu0 %v398
      %v458 = vpop.f32.mrf.mxu0
      %v459 = vadd.f32 0.0, %v458
      %v460 = vpop.f32.mrf.mxu0
      %v461 = vadd.f32 0.0, %v460
      %462 = vmatmul.bf16.gmra.mxu0 %v401
      %v463 = vpop.f32.mrf.mxu0
      %v464 = vadd.f32 0.0, %v463
      %v465 = vpop.f32.mrf.mxu0
      %v466 = vadd.f32 0.0, %v465
      %467 = vmatmul.bf16.gmra.mxu0 %v404
      %v468 = vpop.f32.mrf.mxu0
      %v469 = vadd.f32 0.0, %v468
      %v470 = vpop.f32.mrf.mxu0
      %v471 = vadd.f32 0.0, %v470
      %472 = vmatmul.bf16.gmra.mxu0 %v407
      %v473 = vpop.f32.mrf.mxu0
      %v474 = vadd.f32 0.0, %v473
      %v475 = vpop.f32.mrf.mxu0
      %v476 = vadd.f32 0.0, %v475
      %477 = vmatmul.bf16.gmra.mxu0 %v410
      %v478 = vpop.f32.mrf.mxu0
      %v479 = vadd.f32 0.0, %v478
      %v480 = vpop.f32.mrf.mxu0
      %v481 = vadd.f32 0.0, %v480
      %482 = vmatmul.bf16.gmra.mxu0 %v413
      %v483 = vpop.f32.mrf.mxu0
      %v484 = vadd.f32 0.0, %v483
      %v485 = vpop.f32.mrf.mxu0
      %v486 = vadd.f32 0.0, %v485
      %487 = vmatmul.bf16.gmra.mxu0 %v416
      %v488 = vpop.f32.mrf.mxu0
      %v489 = vadd.f32 0.0, %v488
      %v490 = vpop.f32.mrf.mxu0
      %v491 = vadd.f32 0.0, %v490
      %492 = vmatmul.bf16.gmra.mxu0 %v419
      %v493 = vpop.f32.mrf.mxu0
      %v494 = vadd.f32 0.0, %v493
      %v495 = vpop.f32.mrf.mxu0
      %v496 = vadd.f32 0.0, %v495
      %497 = vmatmul.bf16.gmra.mxu0 %v422
      %v498 = vpop.f32.mrf.mxu0
      %v499 = vadd.f32 0.0, %v498
      %v500 = vpop.f32.mrf.mxu0
      %v501 = vadd.f32 0.0, %v500
      %502 = vmatmul.bf16.gmra.mxu0 %v425
      %v503 = vpop.f32.mrf.mxu0
      %v504 = vadd.f32 0.0, %v503
      %v505 = vpop.f32.mrf.mxu0
      %v506 = vadd.f32 0.0, %v505
      %507 = vmatmul.bf16.gmra.mxu0 %v428
      %v508 = vpop.f32.mrf.mxu0
      %v509 = vadd.f32 0.0, %v508
      %v510 = vpop.f32.mrf.mxu0
      %v511 = vadd.f32 0.0, %v510
      %512 = vmatmul.bf16.gmra.mxu0 %v431
      %v513 = vpop.f32.mrf.mxu0
      %v514 = vadd.f32 0.0, %v513
      %v515 = vpop.f32.mrf.mxu0
      %v516 = vadd.f32 0.0, %v515
      %517 = vmatmul.bf16.gmra.mxu0 %v434
      %v518 = vpop.f32.mrf.mxu0
      %v519 = vadd.f32 0.0, %v518
      %v520 = vpop.f32.mrf.mxu0
      %v521 = vadd.f32 0.0, %v520
      %522 = vmatmul.bf16.gmra.mxu0 %v437
      %v523 = vpop.f32.mrf.mxu0
      %v524 = vadd.f32 0.0, %v523
      %v525 = vpop.f32.mrf.mxu0
      %v526 = vadd.f32 0.0, %v525
      %527 = vdwg.mxu0
      %vm528 = vcmp.gt.f32.partialorder %v449, -1.0
      %vm529 = vcmp.gt.f32.partialorder %v451, -1.0
      %vm530 = vcmp.gt.f32.partialorder %v454, -1.0
      %vm531 = vcmp.gt.f32.partialorder %v456, -1.0
      %vm532 = vcmp.gt.f32.partialorder %v459, -1.0
      %vm533 = vcmp.gt.f32.partialorder %v461, -1.0
      %vm534 = vcmp.gt.f32.partialorder %v464, -1.0
      %vm535 = vcmp.gt.f32.partialorder %v466, -1.0
      %vm536 = vcmp.gt.f32.partialorder %v469, -1.0
      %vm537 = vcmp.gt.f32.partialorder %v471, -1.0
      %vm538 = vcmp.gt.f32.partialorder %v474, -1.0
      %vm539 = vcmp.gt.f32.partialorder %v476, -1.0
      %vm540 = vcmp.gt.f32.partialorder %v479, -1.0
      %vm541 = vcmp.gt.f32.partialorder %v481, -1.0
      %vm542 = vcmp.gt.f32.partialorder %v484, -1.0
      %vm543 = vcmp.gt.f32.partialorder %v486, -1.0
      %vm544 = vcmp.gt.f32.partialorder %v489, -1.0
      %vm545 = vcmp.gt.f32.partialorder %v491, -1.0
      %vm546 = vcmp.gt.f32.partialorder %v494, -1.0
      %vm547 = vcmp.gt.f32.partialorder %v496, -1.0
      %vm548 = vcmp.gt.f32.partialorder %v499, -1.0
      %vm549 = vcmp.gt.f32.partialorder %v501, -1.0
      %vm550 = vcmp.gt.f32.partialorder %v504, -1.0
      %vm551 = vcmp.gt.f32.partialorder %v506, -1.0
      %vm552 = vcmp.gt.f32.partialorder %v509, -1.0
      %vm553 = vcmp.gt.f32.partialorder %v511, -1.0
      %vm554 = vcmp.gt.f32.partialorder %v514, -1.0
      %vm555 = vcmp.gt.f32.partialorder %v516, -1.0
      %vm556 = vcmp.gt.f32.partialorder %v519, -1.0
      %vm557 = vcmp.gt.f32.partialorder %v521, -1.0
      %vm558 = vcmp.gt.f32.partialorder %v524, -1.0
      %vm559 = vcmp.gt.f32.partialorder %v526, -1.0
      %v560 = vsel %vm528, 1, 0
      %v561 = vsel %vm529, 1, 0
      %v562 = vsel %vm530, 1, 0
      %v563 = vsel %vm531, 1, 0
      %v564 = vsel %vm532, 1, 0
      %v565 = vsel %vm533, 1, 0
      %v566 = vsel %vm534, 1, 0
      %v567 = vsel %vm535, 1, 0
      %v568 = vsel %vm536, 1, 0
      %v569 = vsel %vm537, 1, 0
      %v570 = vsel %vm538, 1, 0
      %v571 = vsel %vm539, 1, 0
      %v572 = vsel %vm540, 1, 0
      %v573 = vsel %vm541, 1, 0
      %v574 = vsel %vm542, 1, 0
      %v575 = vsel %vm543, 1, 0
      %v576 = vsel %vm544, 1, 0
      %v577 = vsel %vm545, 1, 0
      %v578 = vsel %vm546, 1, 0
      %v579 = vsel %vm547, 1, 0
      %v580 = vsel %vm548, 1, 0
      %v581 = vsel %vm549, 1, 0
      %v582 = vsel %vm550, 1, 0
      %v583 = vsel %vm551, 1, 0
      %v584 = vsel %vm552, 1, 0
      %v585 = vsel %vm553, 1, 0
      %v586 = vsel %vm554, 1, 0
      %v587 = vsel %vm555, 1, 0
      %v588 = vsel %vm556, 1, 0
      %v589 = vsel %vm557, 1, 0
      %v590 = vsel %vm558, 1, 0
      %v591 = vsel %vm559, 1, 0
      %v592 = vcvt.s32.f32 %v560
      %v593 = vcvt.s32.f32 %v561
      %v594 = vcvt.s32.f32 %v562
      %v595 = vcvt.s32.f32 %v563
      %v596 = vcvt.s32.f32 %v564
      %v597 = vcvt.s32.f32 %v565
      %v598 = vcvt.s32.f32 %v566
      %v599 = vcvt.s32.f32 %v567
      %v600 = vcvt.s32.f32 %v568
      %v601 = vcvt.s32.f32 %v569
      %v602 = vcvt.s32.f32 %v570
      %v603 = vcvt.s32.f32 %v571
      %v604 = vcvt.s32.f32 %v572
      %v605 = vcvt.s32.f32 %v573
      %v606 = vcvt.s32.f32 %v574
      %v607 = vcvt.s32.f32 %v575
      %v608 = vcvt.s32.f32 %v576
      %v609 = vcvt.s32.f32 %v577
      %v610 = vcvt.s32.f32 %v578
      %v611 = vcvt.s32.f32 %v579
      %v612 = vcvt.s32.f32 %v580
      %v613 = vcvt.s32.f32 %v581
      %v614 = vcvt.s32.f32 %v582
      %v615 = vcvt.s32.f32 %v583
      %v616 = vcvt.s32.f32 %v584
      %v617 = vcvt.s32.f32 %v585
      %v618 = vcvt.s32.f32 %v586
      %v619 = vcvt.s32.f32 %v587
      %v620 = vcvt.s32.f32 %v588
      %v621 = vcvt.s32.f32 %v589
      %v622 = vcvt.s32.f32 %v590
      %v623 = vcvt.s32.f32 %v591
      %v624 = vld [vmem:[%s3] sm:$0x1]
      %v626 = vperm.slane %v624, 0
      %v628 = vmul.f32 %v592, %v626
      %v629 = vmul.f32 %v593, %v626
      %v630 = vmul.f32 %v594, %v626
      %v631 = vmul.f32 %v595, %v626
      %v632 = vmul.f32 %v596, %v626
      %v633 = vmul.f32 %v597, %v626
      %v634 = vmul.f32 %v598, %v626
      %v635 = vmul.f32 %v599, %v626
      %v636 = vmul.f32 %v600, %v626
      %v637 = vmul.f32 %v601, %v626
      %v638 = vmul.f32 %v602, %v626
      %v639 = vmul.f32 %v603, %v626
      %v640 = vmul.f32 %v604, %v626
      %v641 = vmul.f32 %v605, %v626
      %v642 = vmul.f32 %v606, %v626
      %v643 = vmul.f32 %v607, %v626
      %v644 = vmul.f32 %v608, %v626
      %v645 = vmul.f32 %v609, %v626
      %v646 = vmul.f32 %v610, %v626
      %v647 = vmul.f32 %v611, %v626
      %v648 = vmul.f32 %v612, %v626
      %v649 = vmul.f32 %v613, %v626
      %v650 = vmul.f32 %v614, %v626
      %v651 = vmul.f32 %v615, %v626
      %v652 = vmul.f32 %v616, %v626
      %v653 = vmul.f32 %v617, %v626
      %v654 = vmul.f32 %v618, %v626
      %v655 = vmul.f32 %v619, %v626
      %v656 = vmul.f32 %v620, %v626
      %v657 = vmul.f32 %v621, %v626
      %v658 = vmul.f32 %v622, %v626
      %v659 = vmul.f32 %v623, %v626
      %660 = vadd.xlane.f32.xlu0 %v628
      %v661 = vpop.xlane.xlu0 %660
      %662 = vadd.xlane.f32.xlu0 %v629
      %v663 = vpop.xlane.xlu0 %662
      %664 = vadd.xlane.f32.xlu0 %v630
      %v665 = vpop.xlane.xlu0 %664
      %666 = vadd.xlane.f32.xlu0 %v631
      %v667 = vpop.xlane.xlu0 %666
      %668 = vadd.xlane.f32.xlu0 %v632
      %v669 = vpop.xlane.xlu0 %668
      %670 = vadd.xlane.f32.xlu0 %v633
      %v671 = vpop.xlane.xlu0 %670
      %672 = vadd.xlane.f32.xlu0 %v634
      %v673 = vpop.xlane.xlu0 %672
      %674 = vadd.xlane.f32.xlu0 %v635
      %v675 = vpop.xlane.xlu0 %674
      %676 = vadd.xlane.f32.xlu0 %v636
      %v677 = vpop.xlane.xlu0 %676
      %678 = vadd.xlane.f32.xlu0 %v637
      %v679 = vpop.xlane.xlu0 %678
      %680 = vadd.xlane.f32.xlu0 %v638
      %v681 = vpop.xlane.xlu0 %680
      %682 = vadd.xlane.f32.xlu0 %v639
      %v683 = vpop.xlane.xlu0 %682
      %684 = vadd.xlane.f32.xlu0 %v640
      %v685 = vpop.xlane.xlu0 %684
      %686 = vadd.xlane.f32.xlu0 %v641
      %v687 = vpop.xlane.xlu0 %686
      %688 = vadd.xlane.f32.xlu0 %v642
      %v689 = vpop.xlane.xlu0 %688
      %690 = vadd.xlane.f32.xlu0 %v643
      %v691 = vpop.xlane.xlu0 %690
      %692 = vadd.xlane.f32.xlu0 %v644
      %v693 = vpop.xlane.xlu0 %692
      %694 = vadd.xlane.f32.xlu0 %v645
      %v695 = vpop.xlane.xlu0 %694
      %696 = vadd.xlane.f32.xlu0 %v646
      %v697 = vpop.xlane.xlu0 %696
      %698 = vadd.xlane.f32.xlu0 %v647
      %v699 = vpop.xlane.xlu0 %698
      %700 = vadd.xlane.f32.xlu0 %v648
      %v701 = vpop.xlane.xlu0 %700
      %702 = vadd.xlane.f32.xlu0 %v649
      %v703 = vpop.xlane.xlu0 %702
      %704 = vadd.xlane.f32.xlu0 %v650
      %v705 = vpop.xlane.xlu0 %704
      %706 = vadd.xlane.f32.xlu0 %v651
      %v707 = vpop.xlane.xlu0 %706
      %708 = vadd.xlane.f32.xlu0 %v652
      %v709 = vpop.xlane.xlu0 %708
      %710 = vadd.xlane.f32.xlu0 %v653
      %v711 = vpop.xlane.xlu0 %710
      %712 = vadd.xlane.f32.xlu0 %v654
      %v713 = vpop.xlane.xlu0 %712
      %714 = vadd.xlane.f32.xlu0 %v655
      %v715 = vpop.xlane.xlu0 %714
      %716 = vadd.xlane.f32.xlu0 %v656
      %v717 = vpop.xlane.xlu0 %716
      %718 = vadd.xlane.f32.xlu0 %v657
      %v719 = vpop.xlane.xlu0 %718
      %720 = vadd.xlane.f32.xlu0 %v658
      %v721 = vpop.xlane.xlu0 %720
      %722 = vadd.xlane.f32.xlu0 %v659
      %v723 = vpop.xlane.xlu0 %722
      %v724 = vadd.f32 %v661, -0.5
      %v725 = vadd.f32 %v663, -0.5
      %v726 = vadd.f32 %v665, -0.5
      %v727 = vadd.f32 %v667, -0.5
      %v728 = vadd.f32 %v669, -0.5
      %v729 = vadd.f32 %v671, -0.5
      %v730 = vadd.f32 %v673, -0.5
      %v731 = vadd.f32 %v675, -0.5
      %v732 = vadd.f32 %v677, -0.5
      %v733 = vadd.f32 %v679, -0.5
      %v734 = vadd.f32 %v681, -0.5
      %v735 = vadd.f32 %v683, -0.5
      %v736 = vadd.f32 %v685, -0.5
      %v737 = vadd.f32 %v687, -0.5
      %v738 = vadd.f32 %v689, -0.5
      %v739 = vadd.f32 %v691, -0.5
      %v740 = vadd.f32 %v693, -0.5
      %v741 = vadd.f32 %v695, -0.5
      %v742 = vadd.f32 %v697, -0.5
      %v743 = vadd.f32 %v699, -0.5
      %v744 = vadd.f32 %v701, -0.5
      %v745 = vadd.f32 %v703, -0.5
      %v746 = vadd.f32 %v705, -0.5
      %v747 = vadd.f32 %v707, -0.5
      %v748 = vadd.f32 %v709, -0.5
      %v749 = vadd.f32 %v711, -0.5
      %v750 = vadd.f32 %v713, -0.5
      %v751 = vadd.f32 %v715, -0.5
      %v752 = vadd.f32 %v717, -0.5
      %v753 = vadd.f32 %v719, -0.5
      %v754 = vadd.f32 %v721, -0.5
      %v755 = vadd.f32 %v723, -0.5
      %vm756 = vcmask 7168
      %757 = vst.msk [vmem:[%s199] sm:$0xff] %vm756, %v724
      %758 = vst.msk [vmem:[%s199 + $0x8] sm:$0xff] %vm756, %v725
      %759 = vst.msk [vmem:[%s199 + $0x10] sm:$0xff] %vm756, %v726
      %760 = vst.msk [vmem:[%s199 + $0x18] sm:$0xff] %vm756, %v727
      %761 = vst.msk [vmem:[%s199 + $0x20] sm:$0xff] %vm756, %v728
      %762 = vst.msk [vmem:[%s199 + $0x28] sm:$0xff] %vm756, %v729
      %763 = vst.msk [vmem:[%s199 + $0x30] sm:$0xff] %vm756, %v730
      %764 = vst.msk [vmem:[%s199 + $0x38] sm:$0xff] %vm756, %v731
      %765 = vst.msk [vmem:[%s199 + $0x40] sm:$0xff] %vm756, %v732
      %766 = vst.msk [vmem:[%s199 + $0x48] sm:$0xff] %vm756, %v733
      %767 = vst.msk [vmem:[%s199 + $0x50] sm:$0xff] %vm756, %v734
      %768 = vst.msk [vmem:[%s199 + $0x58] sm:$0xff] %vm756, %v735
      %769 = vst.msk [vmem:[%s199 + $0x60] sm:$0xff] %vm756, %v736
      %770 = vst.msk [vmem:[%s199 + $0x68] sm:$0xff] %vm756, %v737
      %771 = vst.msk [vmem:[%s199 + $0x70] sm:$0xff] %vm756, %v738
      %772 = vst.msk [vmem:[%s199 + $0x78] sm:$0xff] %vm756, %v739
      %773 = vst.msk [vmem:[%s199 + $0x80] sm:$0xff] %vm756, %v740
      %774 = vst.msk [vmem:[%s199 + $0x88] sm:$0xff] %vm756, %v741
      %775 = vst.msk [vmem:[%s199 + $0x90] sm:$0xff] %vm756, %v742
      %776 = vst.msk [vmem:[%s199 + $0x98] sm:$0xff] %vm756, %v743
      %777 = vst.msk [vmem:[%s199 + $0xa0] sm:$0xff] %vm756, %v744
      %778 = vst.msk [vmem:[%s199 + $0xa8] sm:$0xff] %vm756, %v745
      %779 = vst.msk [vmem:[%s199 + $0xb0] sm:$0xff] %vm756, %v746
      %780 = vst.msk [vmem:[%s199 + $0xb8] sm:$0xff] %vm756, %v747
      %781 = vst.msk [vmem:[%s199 + $0xc0] sm:$0xff] %vm756, %v748
      %782 = vst.msk [vmem:[%s199 + $0xc8] sm:$0xff] %vm756, %v749
      %783 = vst.msk [vmem:[%s199 + $0xd0] sm:$0xff] %vm756, %v750
      %784 = vst.msk [vmem:[%s199 + $0xd8] sm:$0xff] %vm756, %v751
      %785 = vst.msk [vmem:[%s199 + $0xe0] sm:$0xff] %vm756, %v752
      %786 = vst.msk [vmem:[%s199 + $0xe8] sm:$0xff] %vm756, %v753
      %787 = vst.msk [vmem:[%s199 + $0xf0] sm:$0xff] %vm756, %v754
      %788 = vst.msk [vmem:[%s199 + $0xf8] sm:$0xff] %vm756, %v755
      %s789 = smul.u32 32, %s15
      %p790 = scmp.lt.s32.totalorder %s789, 63
      %s791 = scalar_select %p790, %s789, 63
      %s792 = smul.addr %s791, 8
      %s793 = scalar_lea.vmem %s4, %s792
      // Predicated region
      $region37: #{tpu_custom_call.1} parent=35 // pred_check
        %p794 = pneg %p122
      $region38: #{tpu_custom_call.1} parent=35 // pred_check_branch
        %796 = sbr.rel (%p794) target = $region40
      $region39: #{tpu_custom_call.1} parent=35 // pred_region
        %s797 = smul.u32 32, %s15
      $region40: #{tpu_custom_call.1} parent=35 // pred_fallthru
        _
    $region36: #{tpu_custom_call.1} parent=5 // pred_fallthru
      _
    %p798 = scmp.le.s32.totalorder 2, %s10
    // Predicated region
    $region41: #{tpu_custom_call.1} parent=5 // pred_check
      %p799 = pneg %p798
    $region42: #{tpu_custom_call.1} parent=5 // pred_check_branch
      %801 = sbr.rel (%p799) target = $region44
    $region43: #{tpu_custom_call.1} parent=5 // pred_region
      %s802 = ssub.s32 %s10, 2
      // Predicated region
      $region45: #{tpu_custom_call.1} parent=43 // pred_check
        %p803 = pneg %p128
      $region46: #{tpu_custom_call.1} parent=43 // pred_check_branch
        %805 = sbr.rel (%p803) target = $region48
      $region47: #{tpu_custom_call.1} parent=43 // pred_region
        %s806 = smul.u32 32, %s16
        %p807 = scmp.lt.s32.totalorder %s806, 63
        %s808 = scalar_select %p807, %s806, 63
        %s809 = smul.addr %s808, 8
        %s810 = scalar_lea.vmem %s4, %s809
      $region48: #{tpu_custom_call.1} parent=43 // pred_fallthru
        _
    $region44: #{tpu_custom_call.1} parent=5 // pred_fallthru
      _
  $region6: #{tpu_custom_call.1} parent=0 // loop_footer
    %s14 = sadd.s32 1, %s10
  $region7: #{tpu_custom_call.1} parent=0 // loop_footer_branch
    %9 = sbr.rel target = $region3
  $region8: #{tpu_custom_call.1} parent=0 // loop_exit
    _

// kernel: tpu_custom_call.1
$region0: #{tpu_custom_call.1}
  #allocation0 [shape = 'u32[]', space=smem, size = 0x4, offset = 0x4, fixed_abs, tag = 'smem constant byte address 0x4 - core index']
  #allocation1 [shape = 'u32[72,128]{1,0:T(1,128)}', space=vmem, size = 0x9000, scoped, tag = 'internal scratch']
  %s0 = inlined_call_operand.vmem [shape: f32[512,16], index: 0, kind: input, shape index: {}]
  %s1 = inlined_call_operand.vmem [shape: f32[1,16], index: 1, kind: input, shape index: {}]
  %s2 = inlined_call_operand.vmem [shape: bf16[16,128], index: 2, kind: input, shape index: {}]
  %s3 = inlined_call_operand.vmem [shape: f32[1,128], index: 3, kind: input, shape index: {}]
  %s4 = inlined_call_operand.vmem [shape: f32[512,1], index: 4, kind: output, shape index: {}]
  %s5 = sld [smem:[#allocation0]]
  $region49: #{tpu_custom_call.1} parent=0
    _
  %s7 = ssub.s32 1, %s5
  %s8 = scalar_select 0, %s7, %s5
  loop: start=0, step=1, limit=4
  $region2: #{tpu_custom_call.1} parent=0 // loop_pre_header
    _
  $region3: #{tpu_custom_call.1} parent=0 // loop_header
    %s10 = sphi 0, %s14
    %p11 = scmp.ge.s32.totalorder %s10, 4
    %s20 = sphi 0, %s22
    %s23 = sphi 0, %s20
    %s24 = sphi 0, %s23
    %s40 = sphi 0, %s24
    %s44 = sphi 0, %s44
    %s46 = sphi 0, %s44
    %s47 = sphi 0, %s46
    %s61 = sphi 0, %s47
    %s65 = sphi 0, %s65
    %s67 = sphi 0, %s65
    %s68 = sphi 0, %s67
    %s82 = sphi 0, %s68
    %s86 = sphi 0, %s86
    %s88 = sphi 0, %s86
    %s89 = sphi 0, %s88
    %s103 = sphi 0, %s89
    %s109 = sphi 0, %s111
    %s112 = sphi 0, %s109
    %s113 = sphi 0, %s112
    %s129 = sphi 0, %s113
  $region4: #{tpu_custom_call.1} parent=0 // loop_header_branch
    %13 = sbr.rel (%p11) target = $region8
  $region5: #{tpu_custom_call.1} parent=0 // loop_body
    %s15 = ssub.s32 %s10, 1
    %s16 = ssub.s32 %s10, 2
    %s17 = sadd.s32 %s10, 1
    %s18 = ssub.s32 %s10, %s17
    %p19 = scmp.eq.s32.totalorder %s18, 0
    %s21 = sadd.s32 %s20, 1
    %s22 = scalar_select %p19, %s20, %s21
    %p25 = pneg %p19
    %p26 = scmp.eq.s32.totalorder %s10, 1
    %p27 = por %p25, %p26
    %p28 = scmp.ne.s32.totalorder %s20, %s23
    %p29 = scmp.eq.s32.totalorder %s10, 0
    %p30 = por %p28, %p29
    %p31 = scmp.ne.s32.totalorder %s20, %s23
    %p32 = scmp.eq.s32.totalorder %s15, 1
    %p33 = por %p31, %p32
    %p34 = scmp.ne.s32.totalorder %s23, %s24
    %p35 = scmp.eq.s32.totalorder %s15, 0
    %p36 = por %p34, %p35
    %p37 = scmp.ne.s32.totalorder %s23, %s24
    %p38 = scmp.eq.s32.totalorder %s16, 1
    %p39 = por %p37, %p38
    %p41 = scmp.ne.s32.totalorder %s24, %s40
    %p42 = scmp.eq.s32.totalorder %s16, 0
    %p43 = por %p41, %p42
    %s45 = sadd.s32 %s44, 1
    %p48 = scmp.eq.s32.totalorder %s10, 1
    %p49 = scmp.ne.s32.totalorder %s44, %s46
    %p50 = scmp.eq.s32.totalorder %s10, 0
    %p51 = por %p49, %p50
    %p52 = scmp.ne.s32.totalorder %s44, %s46
    %p53 = scmp.eq.s32.totalorder %s15, 1
    %p54 = por %p52, %p53
    %p55 = scmp.ne.s32.totalorder %s46, %s47
    %p56 = scmp.eq.s32.totalorder %s15, 0
    %p57 = por %p55, %p56
    %p58 = scmp.ne.s32.totalorder %s46, %s47
    %p59 = scmp.eq.s32.totalorder %s16, 1
    %p60 = por %p58, %p59
    %p62 = scmp.ne.s32.totalorder %s47, %s61
    %p63 = scmp.eq.s32.totalorder %s16, 0
    %p64 = por %p62, %p63
    %s66 = sadd.s32 %s65, 1
    %p69 = scmp.eq.s32.totalorder %s10, 1
    %p70 = scmp.ne.s32.totalorder %s65, %s67
    %p71 = scmp.eq.s32.totalorder %s10, 0
    %p72 = por %p70, %p71
    %p73 = scmp.ne.s32.totalorder %s65, %s67
    %p74 = scmp.eq.s32.totalorder %s15, 1
    %p75 = por %p73, %p74
    %p76 = scmp.ne.s32.totalorder %s67, %s68
    %p77 = scmp.eq.s32.totalorder %s15, 0
    %p78 = por %p76, %p77
    %p79 = scmp.ne.s32.totalorder %s67, %s68
    %p80 = scmp.eq.s32.totalorder %s16, 1
    %p81 = por %p79, %p80
    %p83 = scmp.ne.s32.totalorder %s68, %s82
    %p84 = scmp.eq.s32.totalorder %s16, 0
    %p85 = por %p83, %p84
    %s87 = sadd.s32 %s86, 1
    %p90 = scmp.eq.s32.totalorder %s10, 1
    %p91 = scmp.ne.s32.totalorder %s86, %s88
    %p92 = scmp.eq.s32.totalorder %s10, 0
    %p93 = por %p91, %p92
    %p94 = scmp.ne.s32.totalorder %s86, %s88
    %p95 = scmp.eq.s32.totalorder %s15, 1
    %p96 = por %p94, %p95
    %p97 = scmp.ne.s32.totalorder %s88, %s89
    %p98 = scmp.eq.s32.totalorder %s15, 0
    %p99 = por %p97, %p98
    %p100 = scmp.ne.s32.totalorder %s88, %s89
    %p101 = scmp.eq.s32.totalorder %s16, 1
    %p102 = por %p100, %p101
    %p104 = scmp.ne.s32.totalorder %s89, %s103
    %p105 = scmp.eq.s32.totalorder %s16, 0
    %p106 = por %p104, %p105
    %s107 = ssub.s32 %s10, %s17
    %p108 = scmp.eq.s32.totalorder %s107, 0
    %s110 = sadd.s32 %s109, 1
    %s111 = scalar_select %p108, %s109, %s110
    %p114 = pneg %p108
    %p115 = scmp.eq.s32.totalorder %s10, 1
    %p116 = por %p114, %p115
    %p117 = scmp.ne.s32.totalorder %s109, %s112
    %p118 = scmp.eq.s32.totalorder %s10, 0
    %p119 = por %p117, %p118
    %p120 = scmp.ne.s32.totalorder %s109, %s112
    %p121 = scmp.eq.s32.totalorder %s15, 1
    %p122 = por %p120, %p121
    %p123 = scmp.ne.s32.totalorder %s112, %s113
    %p124 = scmp.eq.s32.totalorder %s15, 0
    %p125 = por %p123, %p124
    %p126 = scmp.ne.s32.totalorder %s112, %s113
    %p127 = scmp.eq.s32.totalorder %s16, 1
    %p128 = por %p126, %p127
    %p130 = scmp.ne.s32.totalorder %s113, %s129
    %p131 = scmp.eq.s32.totalorder %s16, 0
    %p132 = por %p130, %p131
    %p133 = scmp.le.s32.totalorder 1, %s10
    %p134 = scmp.lt.s32.totalorder %s10, 3
    %p135 = pnand %p133, %p134
    %p136 = pneg %p135
    // Predicated region
    $region9: #{tpu_custom_call.1} parent=5 // pred_check
      _
    $region10: #{tpu_custom_call.1} parent=5 // pred_check_branch
      %138 = sbr.rel (%p135) target = $region12
    $region11: #{tpu_custom_call.1} parent=5 // pred_region
      %s139 = ssub.s32 %s10, 1
      // Predicated region
      $region13: #{tpu_custom_call.1} parent=11 // pred_check
        %p140 = pneg %p57
      $region14: #{tpu_custom_call.1} parent=11 // pred_check_branch
        %142 = sbr.rel (%p140) target = $region16
      $region15: #{tpu_custom_call.1} parent=11 // pred_region
        _
      $region16: #{tpu_custom_call.1} parent=11 // pred_fallthru
        _
      // Predicated region
      $region17: #{tpu_custom_call.1} parent=11 // pred_check
        %p143 = pneg %p78
      $region18: #{tpu_custom_call.1} parent=11 // pred_check_branch
        %145 = sbr.rel (%p143) target = $region20
      $region19: #{tpu_custom_call.1} parent=11 // pred_region
        _
      $region20: #{tpu_custom_call.1} parent=11 // pred_fallthru
        _
      // Predicated region
      $region21: #{tpu_custom_call.1} parent=11 // pred_check
        %p146 = pneg %p99
      $region22: #{tpu_custom_call.1} parent=11 // pred_check_branch
        %148 = sbr.rel (%p146) target = $region24
      $region23: #{tpu_custom_call.1} parent=11 // pred_region
        _
      $region24: #{tpu_custom_call.1} parent=11 // pred_fallthru
        _
    $region12: #{tpu_custom_call.1} parent=5 // pred_fallthru
      _
    %p149 = scmp.lt.s32.totalorder %s10, 2
    // Predicated region
    $region25: #{tpu_custom_call.1} parent=5 // pred_check
      %p150 = pneg %p149
    $region26: #{tpu_custom_call.1} parent=5 // pred_check_branch
      %152 = sbr.rel (%p150) target = $region28
    $region27: #{tpu_custom_call.1} parent=5 // pred_region
      // Predicated region
      $region29: #{tpu_custom_call.1} parent=27 // pred_check
        %p153 = pneg %p30
      $region30: #{tpu_custom_call.1} parent=27 // pred_check_branch
        %155 = sbr.rel (%p153) target = $region32
      $region31: #{tpu_custom_call.1} parent=27 // pred_region
        %s156 = smul.u32 32, %s10
        %p157 = scmp.lt.s32.totalorder %s156, 63
        %s158 = scalar_select %p157, %s156, 63
        %s159 = smul.addr %s158, 8
        %s160 = scalar_lea.vmem %s0, %s159
        %s161 = smul.u32 32, %s10
      $region32: #{tpu_custom_call.1} parent=27 // pred_fallthru
        _
    $region28: #{tpu_custom_call.1} parent=5 // pred_fallthru
      _
    %p162 = scmp.le.s32.totalorder 1, %s10
    %p163 = scmp.lt.s32.totalorder %s10, 3
    %p164 = pnand %p162, %p163
    %p165 = pneg %p164
    // Predicated region
    $region33: #{tpu_custom_call.1} parent=5 // pred_check
      _
    $region34: #{tpu_custom_call.1} parent=5 // pred_check_branch
      %167 = sbr.rel (%p164) target = $region36
    $region35: #{tpu_custom_call.1} parent=5 // pred_region
      %s168 = ssub.s32 %s10, 1
      %s169 = smul.u32 32, %s15
      %p170 = scmp.lt.s32.totalorder %s169, 63
      %s171 = scalar_select %p170, %s169, 63
      %s172 = smul.addr %s171, 8
      %s173 = scalar_lea.vmem %s0, %s172
      %p174 = pneg %p36
      %p175 = pneg %p33
      %p176 = pneg %p57
      %p177 = pneg %p54
      %p178 = pneg %p78
      %p179 = pneg %p75
      %p180 = pneg %p99
      %p181 = pneg %p96
      %p182 = pneg %p125
      %p183 = pneg %p122
      %s184 = smul.u32 32, %s15
      %p185 = scmp.lt.s32.totalorder %s184, 63
      %s186 = scalar_select %p185, %s184, 63
      %s187 = smul.addr %s186, 8
      %s188 = scalar_lea.vmem %s4, %s187
      %s189 = smul.u32 32, %s15
      %p190 = scmp.lt.s32.totalorder %s189, 63
      %s191 = scalar_select %p190, %s189, 63
      %s192 = smul.addr %s191, 8
      %s193 = scalar_lea.vmem %s0, %s192
      %s194 = smul.u32 32, %s15
      %s195 = smul.u32 32, %s15
      %p196 = scmp.lt.s32.totalorder %s195, 63
      %s197 = scalar_select %p196, %s195, 63
      %s198 = smul.addr %s197, 8
      %s199 = scalar_lea.vmem %s4, %s198
      %s200 = smul.u32 32, %s15
      %v202 = vld [vmem:[%s193] sm:$0xff]
      %v203 = vld [vmem:[%s193 + $0x8] sm:$0xff]
      %v204 = vld [vmem:[%s193 + $0x10] sm:$0xff]
      %v205 = vld [vmem:[%s193 + $0x18] sm:$0xff]
      %v206 = vld [vmem:[%s193 + $0x20] sm:$0xff]
      %v207 = vld [vmem:[%s193 + $0x28] sm:$0xff]
      %v208 = vld [vmem:[%s193 + $0x30] sm:$0xff]
      %v209 = vld [vmem:[%s193 + $0x38] sm:$0xff]
      %v210 = vld [vmem:[%s193 + $0x40] sm:$0xff]
      %v211 = vld [vmem:[%s193 + $0x48] sm:$0xff]
      %v212 = vld [vmem:[%s193 + $0x50] sm:$0xff]
      %v213 = vld [vmem:[%s193 + $0x58] sm:$0xff]
      %v214 = vld [vmem:[%s193 + $0x60] sm:$0xff]
      %v215 = vld [vmem:[%s193 + $0x68] sm:$0xff]
      %v216 = vld [vmem:[%s193 + $0x70] sm:$0xff]
      %v217 = vld [vmem:[%s193 + $0x78] sm:$0xff]
      %v218 = vld [vmem:[%s193 + $0x80] sm:$0xff]
      %v219 = vld [vmem:[%s193 + $0x88] sm:$0xff]
      %v220 = vld [vmem:[%s193 + $0x90] sm:$0xff]
      %v221 = vld [vmem:[%s193 + $0x98] sm:$0xff]
      %v222 = vld [vmem:[%s193 + $0xa0] sm:$0xff]
      %v223 = vld [vmem:[%s193 + $0xa8] sm:$0xff]
      %v224 = vld [vmem:[%s193 + $0xb0] sm:$0xff]
      %v225 = vld [vmem:[%s193 + $0xb8] sm:$0xff]
      %v226 = vld [vmem:[%s193 + $0xc0] sm:$0xff]
      %v227 = vld [vmem:[%s193 + $0xc8] sm:$0xff]
      %v228 = vld [vmem:[%s193 + $0xd0] sm:$0xff]
      %v229 = vld [vmem:[%s193 + $0xd8] sm:$0xff]
      %v230 = vld [vmem:[%s193 + $0xe0] sm:$0xff]
      %v231 = vld [vmem:[%s193 + $0xe8] sm:$0xff]
      %v232 = vld [vmem:[%s193 + $0xf0] sm:$0xff]
      %v233 = vld [vmem:[%s193 + $0xf8] sm:$0xff]
      %v234 = vld [vmem:[%s1] sm:$0x1]
      %v236 = vperm.slane %v234, 0
      %v238 = vmul.f32 %v202, %v236
      %v239 = vmul.f32 %v203, %v236
      %v240 = vmul.f32 %v204, %v236
      %v241 = vmul.f32 %v205, %v236
      %v242 = vmul.f32 %v206, %v236
      %v243 = vmul.f32 %v207, %v236
      %v244 = vmul.f32 %v208, %v236
      %v245 = vmul.f32 %v209, %v236
      %v246 = vmul.f32 %v210, %v236
      %v247 = vmul.f32 %v211, %v236
      %v248 = vmul.f32 %v212, %v236
      %v249 = vmul.f32 %v213, %v236
      %v250 = vmul.f32 %v214, %v236
      %v251 = vmul.f32 %v215, %v236
      %v252 = vmul.f32 %v216, %v236
      %v253 = vmul.f32 %v217, %v236
      %v254 = vmul.f32 %v218, %v236
      %v255 = vmul.f32 %v219, %v236
      %v256 = vmul.f32 %v220, %v236
      %v257 = vmul.f32 %v221, %v236
      %v258 = vmul.f32 %v222, %v236
      %v259 = vmul.f32 %v223, %v236
      %v260 = vmul.f32 %v224, %v236
      %v261 = vmul.f32 %v225, %v236
      %v262 = vmul.f32 %v226, %v236
      %v263 = vmul.f32 %v227, %v236
      %v264 = vmul.f32 %v228, %v236
      %v265 = vmul.f32 %v229, %v236
      %v266 = vmul.f32 %v230, %v236
      %v267 = vmul.f32 %v231, %v236
      %v268 = vmul.f32 %v232, %v236
      %v269 = vmul.f32 %v233, %v236
      %vm270 = vcmp.gt.f32.partialorder %v238, 1e-06
      %vm271 = vcmp.gt.f32.partialorder %v239, 1e-06
      %vm272 = vcmp.gt.f32.partialorder %v240, 1e-06
      %vm273 = vcmp.gt.f32.partialorder %v241, 1e-06
      %vm274 = vcmp.gt.f32.partialorder %v242, 1e-06
      %vm275 = vcmp.gt.f32.partialorder %v243, 1e-06
      %vm276 = vcmp.gt.f32.partialorder %v244, 1e-06
      %vm277 = vcmp.gt.f32.partialorder %v245, 1e-06
      %vm278 = vcmp.gt.f32.partialorder %v246, 1e-06
      %vm279 = vcmp.gt.f32.partialorder %v247, 1e-06
      %vm280 = vcmp.gt.f32.partialorder %v248, 1e-06
      %vm281 = vcmp.gt.f32.partialorder %v249, 1e-06
      %vm282 = vcmp.gt.f32.partialorder %v250, 1e-06
      %vm283 = vcmp.gt.f32.partialorder %v251, 1e-06
      %vm284 = vcmp.gt.f32.partialorder %v252, 1e-06
      %vm285 = vcmp.gt.f32.partialorder %v253, 1e-06
      %vm286 = vcmp.gt.f32.partialorder %v254, 1e-06
      %vm287 = vcmp.gt.f32.partialorder %v255, 1e-06
      %vm288 = vcmp.gt.f32.partialorder %v256, 1e-06
      %vm289 = vcmp.gt.f32.partialorder %v257, 1e-06
      %vm290 = vcmp.gt.f32.partialorder %v258, 1e-06
      %vm291 = vcmp.gt.f32.partialorder %v259, 1e-06
      %vm292 = vcmp.gt.f32.partialorder %v260, 1e-06
      %vm293 = vcmp.gt.f32.partialorder %v261, 1e-06
      %vm294 = vcmp.gt.f32.partialorder %v262, 1e-06
      %vm295 = vcmp.gt.f32.partialorder %v263, 1e-06
      %vm296 = vcmp.gt.f32.partialorder %v264, 1e-06
      %vm297 = vcmp.gt.f32.partialorder %v265, 1e-06
      %vm298 = vcmp.gt.f32.partialorder %v266, 1e-06
      %vm299 = vcmp.gt.f32.partialorder %v267, 1e-06
      %vm300 = vcmp.gt.f32.partialorder %v268, 1e-06
      %vm301 = vcmp.gt.f32.partialorder %v269, 1e-06
      %v302 = vsel %vm270, 1, 0
      %v303 = vsel %vm271, 1, 0
      %v304 = vsel %vm272, 1, 0
      %v305 = vsel %vm273, 1, 0
      %v306 = vsel %vm274, 1, 0
      %v307 = vsel %vm275, 1, 0
      %v308 = vsel %vm276, 1, 0
      %v309 = vsel %vm277, 1, 0
      %v310 = vsel %vm278, 1, 0
      %v311 = vsel %vm279, 1, 0
      %v312 = vsel %vm280, 1, 0
      %v313 = vsel %vm281, 1, 0
      %v314 = vsel %vm282, 1, 0
      %v315 = vsel %vm283, 1, 0
      %v316 = vsel %vm284, 1, 0
      %v317 = vsel %vm285, 1, 0
      %v318 = vsel %vm286, 1, 0
      %v319 = vsel %vm287, 1, 0
      %v320 = vsel %vm288, 1, 0
      %v321 = vsel %vm289, 1, 0
      %v322 = vsel %vm290, 1, 0
      %v323 = vsel %vm291, 1, 0
      %v324 = vsel %vm292, 1, 0
      %v325 = vsel %vm293, 1, 0
      %v326 = vsel %vm294, 1, 0
      %v327 = vsel %vm295, 1, 0
      %v328 = vsel %vm296, 1, 0
      %v329 = vsel %vm297, 1, 0
      %v330 = vsel %vm298, 1, 0
      %v331 = vsel %vm299, 1, 0
      %v332 = vsel %vm300, 1, 0
      %v333 = vsel %vm301, 1, 0
      %v334 = vcvt.s32.f32 %v302
      %v335 = vcvt.s32.f32 %v303
      %v336 = vcvt.s32.f32 %v304
      %v337 = vcvt.s32.f32 %v305
      %v338 = vcvt.s32.f32 %v306
      %v339 = vcvt.s32.f32 %v307
      %v340 = vcvt.s32.f32 %v308
      %v341 = vcvt.s32.f32 %v309
      %v342 = vcvt.s32.f32 %v310
      %v343 = vcvt.s32.f32 %v311
      %v344 = vcvt.s32.f32 %v312
      %v345 = vcvt.s32.f32 %v313
      %v346 = vcvt.s32.f32 %v314
      %v347 = vcvt.s32.f32 %v315
      %v348 = vcvt.s32.f32 %v316
      %v349 = vcvt.s32.f32 %v317
      %v350 = vcvt.s32.f32 %v318
      %v351 = vcvt.s32.f32 %v319
      %v352 = vcvt.s32.f32 %v320
      %v353 = vcvt.s32.f32 %v321
      %v354 = vcvt.s32.f32 %v322
      %v355 = vcvt.s32.f32 %v323
      %v356 = vcvt.s32.f32 %v324
      %v357 = vcvt.s32.f32 %v325
      %v358 = vcvt.s32.f32 %v326
      %v359 = vcvt.s32.f32 %v327
      %v360 = vcvt.s32.f32 %v328
      %v361 = vcvt.s32.f32 %v329
      %v362 = vcvt.s32.f32 %v330
      %v363 = vcvt.s32.f32 %v331
      %v364 = vcvt.s32.f32 %v332
      %v365 = vcvt.s32.f32 %v333
      %v366 = vpack.c.bf16 %v335, %v334
      %v367 = vpack.c.bf16 %v337, %v336
      %v368 = vpack.c.bf16 %v339, %v338
      %v369 = vpack.c.bf16 %v341, %v340
      %v370 = vpack.c.bf16 %v343, %v342
      %v371 = vpack.c.bf16 %v345, %v344
      %v372 = vpack.c.bf16 %v347, %v346
      %v373 = vpack.c.bf16 %v349, %v348
      %v374 = vpack.c.bf16 %v351, %v350
      %v375 = vpack.c.bf16 %v353, %v352
      %v376 = vpack.c.bf16 %v355, %v354
      %v377 = vpack.c.bf16 %v357, %v356
      %v378 = vpack.c.bf16 %v359, %v358
      %v379 = vpack.c.bf16 %v361, %v360
      %v380 = vpack.c.bf16 %v363, %v362
      %v381 = vpack.c.bf16 %v365, %v364
      %v382 = vld [vmem:[%s2] sm:$0xf]
      %v383 = vld [vmem:[%s2 + $0x4] sm:$0xf]
      %v386 = vunpack.c.l.b16 %v382
      %v387 = vunpack.c.l.b16 %v383
      %v388 = vpack.c.b16 %v387, %v386
      %vm390 = vcmask 130048
      %v392 = vsel %vm390, %v366, 0
      %v395 = vsel %vm390, %v367, 0
      %v398 = vsel %vm390, %v368, 0
      %v401 = vsel %vm390, %v369, 0
      %v404 = vsel %vm390, %v370, 0
      %v407 = vsel %vm390, %v371, 0
      %v410 = vsel %vm390, %v372, 0
      %v413 = vsel %vm390, %v373, 0
      %v416 = vsel %vm390, %v374, 0
      %v419 = vsel %vm390, %v375, 0
      %v422 = vsel %vm390, %v376, 0
      %v425 = vsel %vm390, %v377, 0
      %v428 = vsel %vm390, %v378, 0
      %v431 = vsel %vm390, %v379, 0
      %v434 = vsel %vm390, %v380, 0
      %v437 = vsel %vm390, %v381, 0
      %439 = vmatpush.bf16.msra.mxu0 0
      %440 = vmatpush.bf16.msra.mxu0 0
      %441 = vmatpush.bf16.msra.mxu0 0
      %442 = vmatpush.bf16.msra.mxu0 0
      %443 = vmatpush.bf16.msra.mxu0 0
      %444 = vmatpush.bf16.msra.mxu0 0
      %445 = vmatpush.bf16.msra.mxu0 0
      %446 = vmatpush.bf16.msra.mxu0 %v388
      %447 = vmatmul.bf16.gmra.mxu0 %v392
      %v448 = vpop.f32.mrf.mxu0
      %v449 = vadd.f32 0.0, %v448
      %v450 = vpop.f32.mrf.mxu0
      %v451 = vadd.f32 0.0, %v450
      %452 = vmatmul.bf16.gmra.mxu0 %v395
      %v453 = vpop.f32.mrf.mxu0
      %v454 = vadd.f32 0.0, %v453
      %v455 = vpop.f32.mrf.mxu0
      %v456 = vadd.f32 0.0, %v455
      %457 = vmatmul.bf16.gmra.mxu0 %v398
      %v458 = vpop.f32.mrf.mxu0
      %v459 = vadd.f32 0.0, %v458
      %v460 = vpop.f32.mrf.mxu0
      %v461 = vadd.f32 0.0, %v460
      %462 = vmatmul.bf16.gmra.mxu0 %v401
      %v463 = vpop.f32.mrf.mxu0
      %v464 = vadd.f32 0.0, %v463
      %v465 = vpop.f32.mrf.mxu0
      %v466 = vadd.f32 0.0, %v465
      %467 = vmatmul.bf16.gmra.mxu0 %v404
      %v468 = vpop.f32.mrf.mxu0
      %v469 = vadd.f32 0.0, %v468
      %v470 = vpop.f32.mrf.mxu0
      %v471 = vadd.f32 0.0, %v470
      %472 = vmatmul.bf16.gmra.mxu0 %v407
      %v473 = vpop.f32.mrf.mxu0
      %v474 = vadd.f32 0.0, %v473
      %v475 = vpop.f32.mrf.mxu0
      %v476 = vadd.f32 0.0, %v475
      %477 = vmatmul.bf16.gmra.mxu0 %v410
      %v478 = vpop.f32.mrf.mxu0
      %v479 = vadd.f32 0.0, %v478
      %v480 = vpop.f32.mrf.mxu0
      %v481 = vadd.f32 0.0, %v480
      %482 = vmatmul.bf16.gmra.mxu0 %v413
      %v483 = vpop.f32.mrf.mxu0
      %v484 = vadd.f32 0.0, %v483
      %v485 = vpop.f32.mrf.mxu0
      %v486 = vadd.f32 0.0, %v485
      %487 = vmatmul.bf16.gmra.mxu0 %v416
      %v488 = vpop.f32.mrf.mxu0
      %v489 = vadd.f32 0.0, %v488
      %v490 = vpop.f32.mrf.mxu0
      %v491 = vadd.f32 0.0, %v490
      %492 = vmatmul.bf16.gmra.mxu0 %v419
      %v493 = vpop.f32.mrf.mxu0
      %v494 = vadd.f32 0.0, %v493
      %v495 = vpop.f32.mrf.mxu0
      %v496 = vadd.f32 0.0, %v495
      %497 = vmatmul.bf16.gmra.mxu0 %v422
      %v498 = vpop.f32.mrf.mxu0
      %v499 = vadd.f32 0.0, %v498
      %v500 = vpop.f32.mrf.mxu0
      %v501 = vadd.f32 0.0, %v500
      %502 = vmatmul.bf16.gmra.mxu0 %v425
      %v503 = vpop.f32.mrf.mxu0
      %v504 = vadd.f32 0.0, %v503
      %v505 = vpop.f32.mrf.mxu0
      %v506 = vadd.f32 0.0, %v505
      %507 = vmatmul.bf16.gmra.mxu0 %v428
      %v508 = vpop.f32.mrf.mxu0
      %v509 = vadd.f32 0.0, %v508
      %v510 = vpop.f32.mrf.mxu0
      %v511 = vadd.f32 0.0, %v510
      %512 = vmatmul.bf16.gmra.mxu0 %v431
      %v513 = vpop.f32.mrf.mxu0
      %v514 = vadd.f32 0.0, %v513
      %v515 = vpop.f32.mrf.mxu0
      %v516 = vadd.f32 0.0, %v515
      %517 = vmatmul.bf16.gmra.mxu0 %v434
      %v518 = vpop.f32.mrf.mxu0
      %v519 = vadd.f32 0.0, %v518
      %v520 = vpop.f32.mrf.mxu0
      %v521 = vadd.f32 0.0, %v520
      %522 = vmatmul.bf16.gmra.mxu0 %v437
      %v523 = vpop.f32.mrf.mxu0
      %v524 = vadd.f32 0.0, %v523
      %v525 = vpop.f32.mrf.mxu0
      %v526 = vadd.f32 0.0, %v525
      %527 = vdwg.mxu0
      %vm528 = vcmp.gt.f32.partialorder %v449, -1.0
      %vm529 = vcmp.gt.f32.partialorder %v451, -1.0
      %vm530 = vcmp.gt.f32.partialorder %v454, -1.0
      %vm531 = vcmp.gt.f32.partialorder %v456, -1.0
      %vm532 = vcmp.gt.f32.partialorder %v459, -1.0
      %vm533 = vcmp.gt.f32.partialorder %v461, -1.0
      %vm534 = vcmp.gt.f32.partialorder %v464, -1.0
      %vm535 = vcmp.gt.f32.partialorder %v466, -1.0
      %vm536 = vcmp.gt.f32.partialorder %v469, -1.0
      %vm537 = vcmp.gt.f32.partialorder %v471, -1.0
      %vm538 = vcmp.gt.f32.partialorder %v474, -1.0
      %vm539 = vcmp.gt.f32.partialorder %v476, -1.0
      %vm540 = vcmp.gt.f32.partialorder %v479, -1.0
      %vm541 = vcmp.gt.f32.partialorder %v481, -1.0
      %vm542 = vcmp.gt.f32.partialorder %v484, -1.0
      %vm543 = vcmp.gt.f32.partialorder %v486, -1.0
      %vm544 = vcmp.gt.f32.partialorder %v489, -1.0
      %vm545 = vcmp.gt.f32.partialorder %v491, -1.0
      %vm546 = vcmp.gt.f32.partialorder %v494, -1.0
      %vm547 = vcmp.gt.f32.partialorder %v496, -1.0
      %vm548 = vcmp.gt.f32.partialorder %v499, -1.0
      %vm549 = vcmp.gt.f32.partialorder %v501, -1.0
      %vm550 = vcmp.gt.f32.partialorder %v504, -1.0
      %vm551 = vcmp.gt.f32.partialorder %v506, -1.0
      %vm552 = vcmp.gt.f32.partialorder %v509, -1.0
      %vm553 = vcmp.gt.f32.partialorder %v511, -1.0
      %vm554 = vcmp.gt.f32.partialorder %v514, -1.0
      %vm555 = vcmp.gt.f32.partialorder %v516, -1.0
      %vm556 = vcmp.gt.f32.partialorder %v519, -1.0
      %vm557 = vcmp.gt.f32.partialorder %v521, -1.0
      %vm558 = vcmp.gt.f32.partialorder %v524, -1.0
      %vm559 = vcmp.gt.f32.partialorder %v526, -1.0
      %v560 = vsel %vm528, 1, 0
      %v561 = vsel %vm529, 1, 0
      %v562 = vsel %vm530, 1, 0
      %v563 = vsel %vm531, 1, 0
      %v564 = vsel %vm532, 1, 0
      %v565 = vsel %vm533, 1, 0
      %v566 = vsel %vm534, 1, 0
      %v567 = vsel %vm535, 1, 0
      %v568 = vsel %vm536, 1, 0
      %v569 = vsel %vm537, 1, 0
      %v570 = vsel %vm538, 1, 0
      %v571 = vsel %vm539, 1, 0
      %v572 = vsel %vm540, 1, 0
      %v573 = vsel %vm541, 1, 0
      %v574 = vsel %vm542, 1, 0
      %v575 = vsel %vm543, 1, 0
      %v576 = vsel %vm544, 1, 0
      %v577 = vsel %vm545, 1, 0
      %v578 = vsel %vm546, 1, 0
      %v579 = vsel %vm547, 1, 0
      %v580 = vsel %vm548, 1, 0
      %v581 = vsel %vm549, 1, 0
      %v582 = vsel %vm550, 1, 0
      %v583 = vsel %vm551, 1, 0
      %v584 = vsel %vm552, 1, 0
      %v585 = vsel %vm553, 1, 0
      %v586 = vsel %vm554, 1, 0
      %v587 = vsel %vm555, 1, 0
      %v588 = vsel %vm556, 1, 0
      %v589 = vsel %vm557, 1, 0
      %v590 = vsel %vm558, 1, 0
      %v591 = vsel %vm559, 1, 0
      %v592 = vcvt.s32.f32 %v560
      %v593 = vcvt.s32.f32 %v561
      %v594 = vcvt.s32.f32 %v562
      %v595 = vcvt.s32.f32 %v563
      %v596 = vcvt.s32.f32 %v564
      %v597 = vcvt.s32.f32 %v565
      %v598 = vcvt.s32.f32 %v566
      %v599 = vcvt.s32.f32 %v567
      %v600 = vcvt.s32.f32 %v568
      %v601 = vcvt.s32.f32 %v569
      %v602 = vcvt.s32.f32 %v570
      %v603 = vcvt.s32.f32 %v571
      %v604 = vcvt.s32.f32 %v572
      %v605 = vcvt.s32.f32 %v573
      %v606 = vcvt.s32.f32 %v574
      %v607 = vcvt.s32.f32 %v575
      %v608 = vcvt.s32.f32 %v576
      %v609 = vcvt.s32.f32 %v577
      %v610 = vcvt.s32.f32 %v578
      %v611 = vcvt.s32.f32 %v579
      %v612 = vcvt.s32.f32 %v580
      %v613 = vcvt.s32.f32 %v581
      %v614 = vcvt.s32.f32 %v582
      %v615 = vcvt.s32.f32 %v583
      %v616 = vcvt.s32.f32 %v584
      %v617 = vcvt.s32.f32 %v585
      %v618 = vcvt.s32.f32 %v586
      %v619 = vcvt.s32.f32 %v587
      %v620 = vcvt.s32.f32 %v588
      %v621 = vcvt.s32.f32 %v589
      %v622 = vcvt.s32.f32 %v590
      %v623 = vcvt.s32.f32 %v591
      %v624 = vld [vmem:[%s3] sm:$0x1]
      %v626 = vperm.slane %v624, 0
      %v628 = vmul.f32 %v592, %v626
      %v629 = vmul.f32 %v593, %v626
      %v630 = vmul.f32 %v594, %v626
      %v631 = vmul.f32 %v595, %v626
      %v632 = vmul.f32 %v596, %v626
      %v633 = vmul.f32 %v597, %v626
      %v634 = vmul.f32 %v598, %v626
      %v635 = vmul.f32 %v599, %v626
      %v636 = vmul.f32 %v600, %v626
      %v637 = vmul.f32 %v601, %v626
      %v638 = vmul.f32 %v602, %v626
      %v639 = vmul.f32 %v603, %v626
      %v640 = vmul.f32 %v604, %v626
      %v641 = vmul.f32 %v605, %v626
      %v642 = vmul.f32 %v606, %v626
      %v643 = vmul.f32 %v607, %v626
      %v644 = vmul.f32 %v608, %v626
      %v645 = vmul.f32 %v609, %v626
      %v646 = vmul.f32 %v610, %v626
      %v647 = vmul.f32 %v611, %v626
      %v648 = vmul.f32 %v612, %v626
      %v649 = vmul.f32 %v613, %v626
      %v650 = vmul.f32 %v614, %v626
      %v651 = vmul.f32 %v615, %v626
      %v652 = vmul.f32 %v616, %v626
      %v653 = vmul.f32 %v617, %v626
      %v654 = vmul.f32 %v618, %v626
      %v655 = vmul.f32 %v619, %v626
      %v656 = vmul.f32 %v620, %v626
      %v657 = vmul.f32 %v621, %v626
      %v658 = vmul.f32 %v622, %v626
      %v659 = vmul.f32 %v623, %v626
      %660 = vadd.xlane.f32.xlu0 %v628
      %v661 = vpop.xlane.xlu0 %660
      %662 = vadd.xlane.f32.xlu0 %v629
      %v663 = vpop.xlane.xlu0 %662
      %664 = vadd.xlane.f32.xlu0 %v630
      %v665 = vpop.xlane.xlu0 %664
      %666 = vadd.xlane.f32.xlu0 %v631
      %v667 = vpop.xlane.xlu0 %666
      %668 = vadd.xlane.f32.xlu0 %v632
      %v669 = vpop.xlane.xlu0 %668
      %670 = vadd.xlane.f32.xlu0 %v633
      %v671 = vpop.xlane.xlu0 %670
      %672 = vadd.xlane.f32.xlu0 %v634
      %v673 = vpop.xlane.xlu0 %672
      %674 = vadd.xlane.f32.xlu0 %v635
      %v675 = vpop.xlane.xlu0 %674
      %676 = vadd.xlane.f32.xlu0 %v636
      %v677 = vpop.xlane.xlu0 %676
      %678 = vadd.xlane.f32.xlu0 %v637
      %v679 = vpop.xlane.xlu0 %678
      %680 = vadd.xlane.f32.xlu0 %v638
      %v681 = vpop.xlane.xlu0 %680
      %682 = vadd.xlane.f32.xlu0 %v639
      %v683 = vpop.xlane.xlu0 %682
      %684 = vadd.xlane.f32.xlu0 %v640
      %v685 = vpop.xlane.xlu0 %684
      %686 = vadd.xlane.f32.xlu0 %v641
      %v687 = vpop.xlane.xlu0 %686
      %688 = vadd.xlane.f32.xlu0 %v642
      %v689 = vpop.xlane.xlu0 %688
      %690 = vadd.xlane.f32.xlu0 %v643
      %v691 = vpop.xlane.xlu0 %690
      %692 = vadd.xlane.f32.xlu0 %v644
      %v693 = vpop.xlane.xlu0 %692
      %694 = vadd.xlane.f32.xlu0 %v645
      %v695 = vpop.xlane.xlu0 %694
      %696 = vadd.xlane.f32.xlu0 %v646
      %v697 = vpop.xlane.xlu0 %696
      %698 = vadd.xlane.f32.xlu0 %v647
      %v699 = vpop.xlane.xlu0 %698
      %700 = vadd.xlane.f32.xlu0 %v648
      %v701 = vpop.xlane.xlu0 %700
      %702 = vadd.xlane.f32.xlu0 %v649
      %v703 = vpop.xlane.xlu0 %702
      %704 = vadd.xlane.f32.xlu0 %v650
      %v705 = vpop.xlane.xlu0 %704
      %706 = vadd.xlane.f32.xlu0 %v651
      %v707 = vpop.xlane.xlu0 %706
      %708 = vadd.xlane.f32.xlu0 %v652
      %v709 = vpop.xlane.xlu0 %708
      %710 = vadd.xlane.f32.xlu0 %v653
      %v711 = vpop.xlane.xlu0 %710
      %712 = vadd.xlane.f32.xlu0 %v654
      %v713 = vpop.xlane.xlu0 %712
      %714 = vadd.xlane.f32.xlu0 %v655
      %v715 = vpop.xlane.xlu0 %714
      %716 = vadd.xlane.f32.xlu0 %v656
      %v717 = vpop.xlane.xlu0 %716
      %718 = vadd.xlane.f32.xlu0 %v657
      %v719 = vpop.xlane.xlu0 %718
      %720 = vadd.xlane.f32.xlu0 %v658
      %v721 = vpop.xlane.xlu0 %720
      %722 = vadd.xlane.f32.xlu0 %v659
      %v723 = vpop.xlane.xlu0 %722
      %v724 = vadd.f32 %v661, -0.5
      %v725 = vadd.f32 %v663, -0.5
      %v726 = vadd.f32 %v665, -0.5
      %v727 = vadd.f32 %v667, -0.5
      %v728 = vadd.f32 %v669, -0.5
      %v729 = vadd.f32 %v671, -0.5
      %v730 = vadd.f32 %v673, -0.5
      %v731 = vadd.f32 %v675, -0.5
      %v732 = vadd.f32 %v677, -0.5
      %v733 = vadd.f32 %v679, -0.5
      %v734 = vadd.f32 %v681, -0.5
      %v735 = vadd.f32 %v683, -0.5
      %v736 = vadd.f32 %v685, -0.5
      %v737 = vadd.f32 %v687, -0.5
      %v738 = vadd.f32 %v689, -0.5
      %v739 = vadd.f32 %v691, -0.5
      %v740 = vadd.f32 %v693, -0.5
      %v741 = vadd.f32 %v695, -0.5
      %v742 = vadd.f32 %v697, -0.5
      %v743 = vadd.f32 %v699, -0.5
      %v744 = vadd.f32 %v701, -0.5
      %v745 = vadd.f32 %v703, -0.5
      %v746 = vadd.f32 %v705, -0.5
      %v747 = vadd.f32 %v707, -0.5
      %v748 = vadd.f32 %v709, -0.5
      %v749 = vadd.f32 %v711, -0.5
      %v750 = vadd.f32 %v713, -0.5
      %v751 = vadd.f32 %v715, -0.5
      %v752 = vadd.f32 %v717, -0.5
      %v753 = vadd.f32 %v719, -0.5
      %v754 = vadd.f32 %v721, -0.5
      %v755 = vadd.f32 %v723, -0.5
      %vm756 = vcmask 7168
      %757 = vst.msk [vmem:[%s199] sm:$0xff] %vm756, %v724
      %758 = vst.msk [vmem:[%s199 + $0x8] sm:$0xff] %vm756, %v725
      %759 = vst.msk [vmem:[%s199 + $0x10] sm:$0xff] %vm756, %v726
      %760 = vst.msk [vmem:[%s199 + $0x18] sm:$0xff] %vm756, %v727
      %761 = vst.msk [vmem:[%s199 + $0x20] sm:$0xff] %vm756, %v728
      %762 = vst.msk [vmem:[%s199 + $0x28] sm:$0xff] %vm756, %v729
      %763 = vst.msk [vmem:[%s199 + $0x30] sm:$0xff] %vm756, %v730
      %764 = vst.msk [vmem:[%s199 + $0x38] sm:$0xff] %vm756, %v731
      %765 = vst.msk [vmem:[%s199 + $0x40] sm:$0xff] %vm756, %v732
      %766 = vst.msk [vmem:[%s199 + $0x48] sm:$0xff] %vm756, %v733
      %767 = vst.msk [vmem:[%s199 + $0x50] sm:$0xff] %vm756, %v734
      %768 = vst.msk [vmem:[%s199 + $0x58] sm:$0xff] %vm756, %v735
      %769 = vst.msk [vmem:[%s199 + $0x60] sm:$0xff] %vm756, %v736
      %770 = vst.msk [vmem:[%s199 + $0x68] sm:$0xff] %vm756, %v737
      %771 = vst.msk [vmem:[%s199 + $0x70] sm:$0xff] %vm756, %v738
      %772 = vst.msk [vmem:[%s199 + $0x78] sm:$0xff] %vm756, %v739
      %773 = vst.msk [vmem:[%s199 + $0x80] sm:$0xff] %vm756, %v740
      %774 = vst.msk [vmem:[%s199 + $0x88] sm:$0xff] %vm756, %v741
      %775 = vst.msk [vmem:[%s199 + $0x90] sm:$0xff] %vm756, %v742
      %776 = vst.msk [vmem:[%s199 + $0x98] sm:$0xff] %vm756, %v743
      %777 = vst.msk [vmem:[%s199 + $0xa0] sm:$0xff] %vm756, %v744
      %778 = vst.msk [vmem:[%s199 + $0xa8] sm:$0xff] %vm756, %v745
      %779 = vst.msk [vmem:[%s199 + $0xb0] sm:$0xff] %vm756, %v746
      %780 = vst.msk [vmem:[%s199 + $0xb8] sm:$0xff] %vm756, %v747
      %781 = vst.msk [vmem:[%s199 + $0xc0] sm:$0xff] %vm756, %v748
      %782 = vst.msk [vmem:[%s199 + $0xc8] sm:$0xff] %vm756, %v749
      %783 = vst.msk [vmem:[%s199 + $0xd0] sm:$0xff] %vm756, %v750
      %784 = vst.msk [vmem:[%s199 + $0xd8] sm:$0xff] %vm756, %v751
      %785 = vst.msk [vmem:[%s199 + $0xe0] sm:$0xff] %vm756, %v752
      %786 = vst.msk [vmem:[%s199 + $0xe8] sm:$0xff] %vm756, %v753
      %787 = vst.msk [vmem:[%s199 + $0xf0] sm:$0xff] %vm756, %v754
      %788 = vst.msk [vmem:[%s199 + $0xf8] sm:$0xff] %vm756, %v755
      %s789 = smul.u32 32, %s15
      %p790 = scmp.lt.s32.totalorder %s789, 63
      %s791 = scalar_select %p790, %s789, 63
      %s792 = smul.addr %s791, 8
      %s793 = scalar_lea.vmem %s4, %s792
      // Predicated region
      $region37: #{tpu_custom_call.1} parent=35 // pred_check
        %p794 = pneg %p122
      $region38: #{tpu_custom_call.1} parent=35 // pred_check_branch
        %796 = sbr.rel (%p794) target = $region40
      $region39: #{tpu_custom_call.1} parent=35 // pred_region
        %s797 = smul.u32 32, %s15
      $region40: #{tpu_custom_call.1} parent=35 // pred_fallthru
        _
    $region36: #{tpu_custom_call.1} parent=5 // pred_fallthru
      _
    %p798 = scmp.le.s32.totalorder 2, %s10
    // Predicated region
    $region41: #{tpu_custom_call.1} parent=5 // pred_check
      %p799 = pneg %p798
    $region42: #{tpu_custom_call.1} parent=5 // pred_check_branch
      %801 = sbr.rel (%p799) target = $region44
    $region43: #{tpu_custom_call.1} parent=5 // pred_region
      %s802 = ssub.s32 %s10, 2
      // Predicated region
      $region45: #{tpu_custom_call.1} parent=43 // pred_check
        %p803 = pneg %p128
      $region46: #{tpu_custom_call.1} parent=43 // pred_check_branch
        %805 = sbr.rel (%p803) target = $region48
      $region47: #{tpu_custom_call.1} parent=43 // pred_region
        %s806 = smul.u32 32, %s16
        %p807 = scmp.lt.s32.totalorder %s806, 63
        %s808 = scalar_select %p807, %s806, 63
        %s809 = smul.addr %s808, 8
        %s810 = scalar_lea.vmem %s4, %s809
      $region48: #{tpu_custom_call.1} parent=43 // pred_fallthru
        _
    $region44: #{tpu_custom_call.1} parent=5 // pred_fallthru
      _
  $region6: #{tpu_custom_call.1} parent=0 // loop_footer
    %s14 = sadd.s32 1, %s10
  $region7: #{tpu_custom_call.1} parent=0 // loop_footer_branch
    %9 = sbr.rel target = $region3
  $region8: #{tpu_custom_call.1} parent=0 // loop_exit
    _

</llo_original>
